<compile_context>
chip_gen: v6e
topology: v6e:2x2x1
jax: 0.10.0
libtpu: 0.0.40
codegen_flags: <defaults>
</compile_context>

<pallas_src>
import jax
import jax.numpy as jnp
from jax.experimental import pallas as pl
from jax.experimental.pallas import tpu as pltpu


# ----------------------------- kernel ---------------------------------------

def _extract_block_kernel(x_ref, ms_ref, m1_ref, m2_ref, m3_ref, b_ref, o_ref):
    """Fused ExtractBlock forward for one batch element (lane-dense 2-D slabs).

    Refs:
      x_ref  : (1, H, W*Cin)               input slab
      m*_ref : (3, W*Cin|W*Cout, W*Cout)   banded conv matrices (VMEM resident)
      b_ref  : (3, W*Cout) f32             lane-tiled biases [l1, l2, l3+short]
      o_ref  : (1, H, W*Cout)              output slab (lane-dense store)
    """
    _, H, WCo = o_ref.shape
    cdt = x_ref.dtype  # compute dtype for MXU operands (f32 or bf16)

    # Sub/super-diagonal permutation matrices:
    #   up   @ a : row h holds a[h-1]  (row 0   = 0  -> top zero padding)
    #   down @ a : row h holds a[h+1]  (row H-1 = 0  -> bottom zero padding)
    # Row shifts therefore run on the (otherwise idle) MXU; no misaligned
    # sublane slices, rolls, or retile copies anywhere in the kernel.
    r = jax.lax.broadcasted_iota(jnp.int32, (H, H), 0)
    c = jax.lax.broadcasted_iota(jnp.int32, (H, H), 1)
    up = (c == r - 1).astype(cdt)
    down = (c == r + 1).astype(cdt)

    def shifts(a):
        return jnp.dot(up, a), jnp.dot(down, a)

    def conv3x3(a, a_up, a_dn, m_ref, acc):
        # 3x3 SAME conv = three banded MXU matmuls (dy = 0, 1, 2), f32 acc.
        acc = acc + jnp.dot(a_up, m_ref[0], preferred_element_type=jnp.float32)
        acc = acc + jnp.dot(a,    m_ref[1], preferred_element_type=jnp.float32)
        acc = acc + jnp.dot(a_dn, m_ref[2], preferred_element_type=jnp.float32)
        return acc

    def bias(i):  # accumulator init = broadcast lane-tiled bias (already f32)
        return jnp.broadcast_to(b_ref[i:i + 1, :], (H, WCo)).astype(jnp.float32)

    x2d = x_ref[0]                         # (H, W*Cin), used directly (no copy)
    x_up, x_dn = shifts(x2d)               # shared by short conv and long conv1

    # ---- long path: conv1 -> SiLU -> conv2 -> SiLU --------------------------
    h1 = conv3x3(x2d, x_up, x_dn, m1_ref, bias(0))
    h1 = (h1 * jax.nn.sigmoid(h1)).astype(cdt)          # SiLU in f32 (EUP)
    h1_up, h1_dn = shifts(h1)

    h2 = conv3x3(h1, h1_up, h1_dn, m2_ref, bias(1))
    h2 = (h2 * jax.nn.sigmoid(h2)).astype(cdt)
    h2_up, h2_dn = shifts(h2)

    # ---- long conv3 (Dropout == identity at inference) + short conv, both
    #      accumulated into one f32 accumulator (biases pre-summed), then the
    #      fused ReLU join and one lane-dense store. ---------------------------
    y = conv3x3(h2, h2_up, h2_dn, m3_ref, bias(2))
    y = conv3x3(x2d, x_up, x_dn, ms_ref, y)
    o_ref[0] = jnp.maximum(y, 0.0).astype(o_ref.dtype)


# ----------------------------- wrapper ---------------------------------------

def _band_matrices(w_hwio, width, dtype):
    """HWIO (3,3,Cin,Cout) -> (3, width*Cin, width*Cout) banded matrices.

    M_dy[w_in*Cin + ci, w_out*Cout + co] = w[dy, w_in - w_out + 1, ci, co]
    (zero outside the band), so `row_slab(dy) @ M_dy` performs the dx and
    channel contractions of a SAME-padded 3x3 conv for every output column
    at once; the left/right zero padding is absorbed by the clipped band.
    """
    _, _, cin, cout = w_hwio.shape
    mats = []
    for dy in range(3):
        m = jnp.zeros((width * cin, width * cout), jnp.float32)
        for dx in range(3):
            band = jnp.eye(width, width, k=1 - dx, dtype=jnp.float32)
            m = m + jnp.kron(band, w_hwio[dy, dx].astype(jnp.float32))
        mats.append(m)
    return jnp.stack(mats, axis=0).astype(dtype)


def extract_block_forward(x_nhwc, params):
    """ReLU(long(x) + short(x)); NHWC in / NHWC out; one fused pallas_call."""
    N, H, W, Cin = x_nhwc.shape
    Cout = params["w_s"].shape[-1]
    dt = x_nhwc.dtype
    WCi, WCo = W * Cin, W * Cout

    # Lane-dense (w, c) packing; free metadata reshape on the XLA side.
    x2 = x_nhwc.reshape(N, H, WCi)

    m_s = _band_matrices(params["w_s"], W, dt)    # (3, WCi, WCo)
    m_l1 = _band_matrices(params["w_l1"], W, dt)  # (3, WCi, WCo)
    m_l2 = _band_matrices(params["w_l2"], W, dt)  # (3, WCo, WCo)
    m_l3 = _band_matrices(params["w_l3"], W, dt)  # (3, WCo, WCo)

    # Lane-tiled, pre-cast f32 biases; conv3 and short-conv biases pre-summed.
    biases = jnp.stack([
        jnp.tile(params["b_l1"].astype(jnp.float32), W),
        jnp.tile(params["b_l2"].astype(jnp.float32), W),
        jnp.tile((params["b_l3"] + params["b_s"]).astype(jnp.float32), W),
    ], axis=0)                                     # (3, WCo)

    const3 = lambda n: (0, 0, 0)                   # weights stay VMEM resident

    out2 = pl.pallas_call(
        _extract_block_kernel,
        out_shape=jax.ShapeDtypeStruct((N, H, WCo), dt),
        grid=(N,),
        in_specs=[
            pl.BlockSpec((1, H, WCi), lambda n: (n, 0, 0)),   # x slab
            pl.BlockSpec((3, WCi, WCo), const3),              # short conv
            pl.BlockSpec((3, WCi, WCo), const3),              # long conv1
            pl.BlockSpec((3, WCo, WCo), const3),              # long conv2
            pl.BlockSpec((3, WCo, WCo), const3),              # long conv3
            pl.BlockSpec((3, WCo), lambda n: (0, 0)),         # biases
        ],
        out_specs=pl.BlockSpec((1, H, WCo), lambda n: (n, 0, 0)),
        compiler_params=pltpu.CompilerParams(
            dimension_semantics=("parallel",)),
    )(x2, m_s, m_l1, m_l2, m_l3, biases)

    return out2.reshape(N, H, W, Cout)


# ---------------- parameter init (deterministic, PyTorch-like fan-in) --------

def init_params(key, ch_in, ch_out, dtype=jnp.float32):
    def conv_init(k, cin, cout):
        kw, kb = jax.random.split(k)
        bound = 1.0 / jnp.sqrt(cin * 9.0)
        w = jax.random.uniform(kw, (3, 3, cin, cout), dtype, -bound, bound)
        b = jax.random.uniform(kb, (cout,), dtype, -bound, bound)
        return w, b

    ks = jax.random.split(key, 4)
    w_s, b_s = conv_init(ks[0], ch_in, ch_out)
    w_l1, b_l1 = conv_init(ks[1], ch_in, ch_out)
    w_l2, b_l2 = conv_init(ks[2], ch_out, ch_out)
    w_l3, b_l3 = conv_init(ks[3], ch_out, ch_out)
    return dict(w_s=w_s, b_s=b_s, w_l1=w_l1, b_l1=b_l1,
                w_l2=w_l2, b_l2=b_l2, w_l3=w_l3, b_l3=b_l3)


# ---------------- pure-JAX reference for a correctness check -----------------

def _conv_ref(x, w, b):
    y = jax.lax.conv_general_dilated(
        x, w, window_strides=(1, 1), padding="SAME",
        dimension_numbers=("NHWC", "HWIO", "NHWC"))
    return y + b


def _extract_block_ref(x, p):
    short = _conv_ref(x, p["w_s"], p["b_s"])
    h = jax.nn.silu(_conv_ref(x, p["w_l1"], p["b_l1"]))
    h = jax.nn.silu(_conv_ref(h, p["w_l2"], p["b_l2"]))
    h = _conv_ref(h, p["w_l3"], p["b_l3"])
    return jax.nn.relu(h + short)


if __name__ == "__main__":
    key = jax.random.PRNGKey(0)
    k_x, k_p = jax.random.split(key)

    N, C_IN, C_OUT, H, W = 2, 4, 8, 16, 16

    # PyTorch-convention NCHW input, transposed to NHWC for the TPU kernel.
    x_nchw = jax.random.normal(k_x, (N, C_IN, H, W), jnp.float32)
    x_nhwc = jnp.transpose(x_nchw, (0, 2, 3, 1))

    params = init_params(k_p, C_IN, C_OUT)

    out = jax.jit(extract_block_forward)(x_nhwc, params)
    out = jax.block_until_ready(out)

    ref = _extract_block_ref(x_nhwc, params)
    assert out.shape == (N, H, W, C_OUT)
    # Tolerance covers MXU f32 multi-pass rounding across the extra
    # permutation matmuls; a real logic bug would be orders of magnitude off.
    assert jnp.allclose(out, ref, atol=1e-3, rtol=1e-3), "mismatch vs reference"

    print("KERNEL_OK")
</pallas_src>

<mosaic_0001>
module attributes {stable_mosaic.version = 11 : i64} {
  func.func @_extract_block_kernel(%arg0: i32, %arg1: memref<1x16x64xf32, #tpu.memory_space<vmem>>, %arg2: memref<3x64x128xf32, #tpu.memory_space<vmem>>, %arg3: memref<3x64x128xf32, #tpu.memory_space<vmem>>, %arg4: memref<3x128x128xf32, #tpu.memory_space<vmem>>, %arg5: memref<3x128x128xf32, #tpu.memory_space<vmem>>, %arg6: memref<3x128xf32, #tpu.memory_space<vmem>>, %arg7: memref<1x16x128xf32, #tpu.memory_space<vmem>>) attributes {dimension_semantics = [#tpu.dimension_semantics<parallel>], iteration_bounds = array<i64: 2>, scalar_prefetch = 0 : i64, scratch_operands = 0 : i64, tpu.core_type = #tpu.core_type<tc>, window_params = [{transform_indices = @transform_0, window_bounds = array<i64: 1, 16, 64>}, {pipeline_mode = #tpu.pipeline_mode<synchronous>, transform_indices = @transform_1, window_bounds = array<i64: 3, 64, 128>}, {pipeline_mode = #tpu.pipeline_mode<synchronous>, transform_indices = @transform_2, window_bounds = array<i64: 3, 64, 128>}, {pipeline_mode = #tpu.pipeline_mode<synchronous>, transform_indices = @transform_3, window_bounds = array<i64: 3, 128, 128>}, {pipeline_mode = #tpu.pipeline_mode<synchronous>, transform_indices = @transform_4, window_bounds = array<i64: 3, 128, 128>}, {pipeline_mode = #tpu.pipeline_mode<synchronous>, transform_indices = @transform_5, window_bounds = array<i64: 3, 128>}, {transform_indices = @transform_6, window_bounds = array<i64: 1, 16, 128>}]} {
    %0 = tpu.iota {dimensions = array<i32: 0>} : vector<16x16xi32>
    %1 = tpu.iota {dimensions = array<i32: 1>} : vector<16x16xi32>
    %c1_i32 = arith.constant 1 : i32
    %2 = vector.broadcast %c1_i32 : i32 to vector<16x16xi32>
    %3 = arith.subi %0, %2 : vector<16x16xi32>
    %4 = arith.cmpi eq, %1, %3 : vector<16x16xi32>
    %5 = arith.extui %4 : vector<16x16xi1> to vector<16x16xi32>
    %6 = arith.sitofp %5 : vector<16x16xi32> to vector<16x16xf32>
    %c1_i32_0 = arith.constant 1 : i32
    %7 = vector.broadcast %c1_i32_0 : i32 to vector<16x16xi32>
    %8 = arith.addi %0, %7 : vector<16x16xi32>
    %9 = arith.cmpi eq, %1, %8 : vector<16x16xi32>
    %10 = arith.extui %9 : vector<16x16xi1> to vector<16x16xi32>
    %11 = arith.sitofp %10 : vector<16x16xi32> to vector<16x16xf32>
    %c0 = arith.constant 0 : index
    %c0_1 = arith.constant 0 : index
    %c0_2 = arith.constant 0 : index
    %12 = vector.load %arg1[%c0, %c0_1, %c0_2] : memref<1x16x64xf32, #tpu.memory_space<vmem>>, vector<1x16x64xf32>
    %13 = vector.shape_cast %12 : vector<1x16x64xf32> to vector<16x64xf32>
    %cst = arith.constant dense<0.000000e+00> : vector<16x64xf32>
    %14 = tpu.matmul %6, %13, %cst {dimension_numbers = #tpu.dot_dimension_numbers<[1], [0], [0], [1], [0, 0, 1, 1], [], []>} : vector<16x16xf32>, vector<16x64xf32>, vector<16x64xf32> -> vector<16x64xf32>
    %cst_3 = arith.constant dense<0.000000e+00> : vector<16x64xf32>
    %15 = tpu.matmul %11, %13, %cst_3 {dimension_numbers = #tpu.dot_dimension_numbers<[1], [0], [0], [1], [0, 0, 1, 1], [], []>} : vector<16x16xf32>, vector<16x64xf32>, vector<16x64xf32> -> vector<16x64xf32>
    %c0_4 = arith.constant 0 : index
    %c0_5 = arith.constant 0 : index
    %16 = vector.load %arg6[%c0_4, %c0_5] : memref<3x128xf32, #tpu.memory_space<vmem>>, vector<1x128xf32>
    %17 = vector.shape_cast %16 : vector<1x128xf32> to vector<1x128xf32>
    %18 = vector.broadcast %17 : vector<1x128xf32> to vector<16x128xf32>
    %c0_6 = arith.constant 0 : index
    %c0_7 = arith.constant 0 : index
    %c0_8 = arith.constant 0 : index
    %19 = vector.load %arg3[%c0_6, %c0_7, %c0_8] : memref<3x64x128xf32, #tpu.memory_space<vmem>>, vector<1x64x128xf32>
    %20 = vector.shape_cast %19 : vector<1x64x128xf32> to vector<64x128xf32>
    %cst_9 = arith.constant dense<0.000000e+00> : vector<16x128xf32>
    %21 = tpu.matmul %14, %20, %cst_9 {dimension_numbers = #tpu.dot_dimension_numbers<[1], [0], [0], [1], [0, 0, 1, 1], [], []>} : vector<16x64xf32>, vector<64x128xf32>, vector<16x128xf32> -> vector<16x128xf32>
    %22 = arith.addf %18, %21 : vector<16x128xf32>
    %c1 = arith.constant 1 : index
    %c0_10 = arith.constant 0 : index
    %c0_11 = arith.constant 0 : index
    %23 = vector.load %arg3[%c1, %c0_10, %c0_11] : memref<3x64x128xf32, #tpu.memory_space<vmem>>, vector<1x64x128xf32>
    %24 = vector.shape_cast %23 : vector<1x64x128xf32> to vector<64x128xf32>
    %cst_12 = arith.constant dense<0.000000e+00> : vector<16x128xf32>
    %25 = tpu.matmul %13, %24, %cst_12 {dimension_numbers = #tpu.dot_dimension_numbers<[1], [0], [0], [1], [0, 0, 1, 1], [], []>} : vector<16x64xf32>, vector<64x128xf32>, vector<16x128xf32> -> vector<16x128xf32>
    %26 = arith.addf %22, %25 : vector<16x128xf32>
    %c2 = arith.constant 2 : index
    %c0_13 = arith.constant 0 : index
    %c0_14 = arith.constant 0 : index
    %27 = vector.load %arg3[%c2, %c0_13, %c0_14] : memref<3x64x128xf32, #tpu.memory_space<vmem>>, vector<1x64x128xf32>
    %28 = vector.shape_cast %27 : vector<1x64x128xf32> to vector<64x128xf32>
    %cst_15 = arith.constant dense<0.000000e+00> : vector<16x128xf32>
    %29 = tpu.matmul %15, %28, %cst_15 {dimension_numbers = #tpu.dot_dimension_numbers<[1], [0], [0], [1], [0, 0, 1, 1], [], []>} : vector<16x64xf32>, vector<64x128xf32>, vector<16x128xf32> -> vector<16x128xf32>
    %30 = arith.addf %26, %29 : vector<16x128xf32>
    %31 = arith.negf %30 : vector<16x128xf32>
    %32 = math.exp %31 : vector<16x128xf32>
    %cst_16 = arith.constant 1.000000e+00 : f32
    %33 = vector.broadcast %cst_16 : f32 to vector<16x128xf32>
    %34 = arith.addf %33, %32 : vector<16x128xf32>
    %35 = arith.divf %33, %34 : vector<16x128xf32>
    %36 = arith.mulf %30, %35 : vector<16x128xf32>
    %cst_17 = arith.constant dense<0.000000e+00> : vector<16x128xf32>
    %37 = tpu.matmul %6, %36, %cst_17 {dimension_numbers = #tpu.dot_dimension_numbers<[1], [0], [0], [1], [0, 0, 1, 1], [], []>} : vector<16x16xf32>, vector<16x128xf32>, vector<16x128xf32> -> vector<16x128xf32>
    %cst_18 = arith.constant dense<0.000000e+00> : vector<16x128xf32>
    %38 = tpu.matmul %11, %36, %cst_18 {dimension_numbers = #tpu.dot_dimension_numbers<[1], [0], [0], [1], [0, 0, 1, 1], [], []>} : vector<16x16xf32>, vector<16x128xf32>, vector<16x128xf32> -> vector<16x128xf32>
    %c1_19 = arith.constant 1 : index
    %c0_20 = arith.constant 0 : index
    %39 = vector.load %arg6[%c1_19, %c0_20] : memref<3x128xf32, #tpu.memory_space<vmem>>, vector<1x128xf32>
    %40 = vector.shape_cast %39 : vector<1x128xf32> to vector<1x128xf32>
    %41 = vector.broadcast %40 : vector<1x128xf32> to vector<16x128xf32>
    %c0_21 = arith.constant 0 : index
    %c0_22 = arith.constant 0 : index
    %c0_23 = arith.constant 0 : index
    %42 = vector.load %arg4[%c0_21, %c0_22, %c0_23] : memref<3x128x128xf32, #tpu.memory_space<vmem>>, vector<1x128x128xf32>
    %43 = vector.shape_cast %42 : vector<1x128x128xf32> to vector<128x128xf32>
    %cst_24 = arith.constant dense<0.000000e+00> : vector<16x128xf32>
    %44 = tpu.matmul %37, %43, %cst_24 {dimension_numbers = #tpu.dot_dimension_numbers<[1], [0], [0], [1], [0, 0, 1, 1], [], []>} : vector<16x128xf32>, vector<128x128xf32>, vector<16x128xf32> -> vector<16x128xf32>
    %45 = arith.addf %41, %44 : vector<16x128xf32>
    %c1_25 = arith.constant 1 : index
    %c0_26 = arith.constant 0 : index
    %c0_27 = arith.constant 0 : index
    %46 = vector.load %arg4[%c1_25, %c0_26, %c0_27] : memref<3x128x128xf32, #tpu.memory_space<vmem>>, vector<1x128x128xf32>
    %47 = vector.shape_cast %46 : vector<1x128x128xf32> to vector<128x128xf32>
    %cst_28 = arith.constant dense<0.000000e+00> : vector<16x128xf32>
    %48 = tpu.matmul %36, %47, %cst_28 {dimension_numbers = #tpu.dot_dimension_numbers<[1], [0], [0], [1], [0, 0, 1, 1], [], []>} : vector<16x128xf32>, vector<128x128xf32>, vector<16x128xf32> -> vector<16x128xf32>
    %49 = arith.addf %45, %48 : vector<16x128xf32>
    %c2_29 = arith.constant 2 : index
    %c0_30 = arith.constant 0 : index
    %c0_31 = arith.constant 0 : index
    %50 = vector.load %arg4[%c2_29, %c0_30, %c0_31] : memref<3x128x128xf32, #tpu.memory_space<vmem>>, vector<1x128x128xf32>
    %51 = vector.shape_cast %50 : vector<1x128x128xf32> to vector<128x128xf32>
    %cst_32 = arith.constant dense<0.000000e+00> : vector<16x128xf32>
    %52 = tpu.matmul %38, %51, %cst_32 {dimension_numbers = #tpu.dot_dimension_numbers<[1], [0], [0], [1], [0, 0, 1, 1], [], []>} : vector<16x128xf32>, vector<128x128xf32>, vector<16x128xf32> -> vector<16x128xf32>
    %53 = arith.addf %49, %52 : vector<16x128xf32>
    %54 = arith.negf %53 : vector<16x128xf32>
    %55 = math.exp %54 : vector<16x128xf32>
    %cst_33 = arith.constant 1.000000e+00 : f32
    %56 = vector.broadcast %cst_33 : f32 to vector<16x128xf32>
    %57 = arith.addf %56, %55 : vector<16x128xf32>
    %58 = arith.divf %56, %57 : vector<16x128xf32>
    %59 = arith.mulf %53, %58 : vector<16x128xf32>
    %cst_34 = arith.constant dense<0.000000e+00> : vector<16x128xf32>
    %60 = tpu.matmul %6, %59, %cst_34 {dimension_numbers = #tpu.dot_dimension_numbers<[1], [0], [0], [1], [0, 0, 1, 1], [], []>} : vector<16x16xf32>, vector<16x128xf32>, vector<16x128xf32> -> vector<16x128xf32>
    %cst_35 = arith.constant dense<0.000000e+00> : vector<16x128xf32>
    %61 = tpu.matmul %11, %59, %cst_35 {dimension_numbers = #tpu.dot_dimension_numbers<[1], [0], [0], [1], [0, 0, 1, 1], [], []>} : vector<16x16xf32>, vector<16x128xf32>, vector<16x128xf32> -> vector<16x128xf32>
    %c2_36 = arith.constant 2 : index
    %c0_37 = arith.constant 0 : index
    %62 = vector.load %arg6[%c2_36, %c0_37] : memref<3x128xf32, #tpu.memory_space<vmem>>, vector<1x128xf32>
    %63 = vector.shape_cast %62 : vector<1x128xf32> to vector<1x128xf32>
    %64 = vector.broadcast %63 : vector<1x128xf32> to vector<16x128xf32>
    %c0_38 = arith.constant 0 : index
    %c0_39 = arith.constant 0 : index
    %c0_40 = arith.constant 0 : index
    %65 = vector.load %arg5[%c0_38, %c0_39, %c0_40] : memref<3x128x128xf32, #tpu.memory_space<vmem>>, vector<1x128x128xf32>
    %66 = vector.shape_cast %65 : vector<1x128x128xf32> to vector<128x128xf32>
    %cst_41 = arith.constant dense<0.000000e+00> : vector<16x128xf32>
    %67 = tpu.matmul %60, %66, %cst_41 {dimension_numbers = #tpu.dot_dimension_numbers<[1], [0], [0], [1], [0, 0, 1, 1], [], []>} : vector<16x128xf32>, vector<128x128xf32>, vector<16x128xf32> -> vector<16x128xf32>
    %68 = arith.addf %64, %67 : vector<16x128xf32>
    %c1_42 = arith.constant 1 : index
    %c0_43 = arith.constant 0 : index
    %c0_44 = arith.constant 0 : index
    %69 = vector.load %arg5[%c1_42, %c0_43, %c0_44] : memref<3x128x128xf32, #tpu.memory_space<vmem>>, vector<1x128x128xf32>
    %70 = vector.shape_cast %69 : vector<1x128x128xf32> to vector<128x128xf32>
    %cst_45 = arith.constant dense<0.000000e+00> : vector<16x128xf32>
    %71 = tpu.matmul %59, %70, %cst_45 {dimension_numbers = #tpu.dot_dimension_numbers<[1], [0], [0], [1], [0, 0, 1, 1], [], []>} : vector<16x128xf32>, vector<128x128xf32>, vector<16x128xf32> -> vector<16x128xf32>
    %72 = arith.addf %68, %71 : vector<16x128xf32>
    %c2_46 = arith.constant 2 : index
    %c0_47 = arith.constant 0 : index
    %c0_48 = arith.constant 0 : index
    %73 = vector.load %arg5[%c2_46, %c0_47, %c0_48] : memref<3x128x128xf32, #tpu.memory_space<vmem>>, vector<1x128x128xf32>
    %74 = vector.shape_cast %73 : vector<1x128x128xf32> to vector<128x128xf32>
    %cst_49 = arith.constant dense<0.000000e+00> : vector<16x128xf32>
    %75 = tpu.matmul %61, %74, %cst_49 {dimension_numbers = #tpu.dot_dimension_numbers<[1], [0], [0], [1], [0, 0, 1, 1], [], []>} : vector<16x128xf32>, vector<128x128xf32>, vector<16x128xf32> -> vector<16x128xf32>
    %76 = arith.addf %72, %75 : vector<16x128xf32>
    %c0_50 = arith.constant 0 : index
    %c0_51 = arith.constant 0 : index
    %c0_52 = arith.constant 0 : index
    %77 = vector.load %arg2[%c0_50, %c0_51, %c0_52] : memref<3x64x128xf32, #tpu.memory_space<vmem>>, vector<1x64x128xf32>
    %78 = vector.shape_cast %77 : vector<1x64x128xf32> to vector<64x128xf32>
    %cst_53 = arith.constant dense<0.000000e+00> : vector<16x128xf32>
    %79 = tpu.matmul %14, %78, %cst_53 {dimension_numbers = #tpu.dot_dimension_numbers<[1], [0], [0], [1], [0, 0, 1, 1], [], []>} : vector<16x64xf32>, vector<64x128xf32>, vector<16x128xf32> -> vector<16x128xf32>
    %80 = arith.addf %76, %79 : vector<16x128xf32>
    %c1_54 = arith.constant 1 : index
    %c0_55 = arith.constant 0 : index
    %c0_56 = arith.constant 0 : index
    %81 = vector.load %arg2[%c1_54, %c0_55, %c0_56] : memref<3x64x128xf32, #tpu.memory_space<vmem>>, vector<1x64x128xf32>
    %82 = vector.shape_cast %81 : vector<1x64x128xf32> to vector<64x128xf32>
    %cst_57 = arith.constant dense<0.000000e+00> : vector<16x128xf32>
    %83 = tpu.matmul %13, %82, %cst_57 {dimension_numbers = #tpu.dot_dimension_numbers<[1], [0], [0], [1], [0, 0, 1, 1], [], []>} : vector<16x64xf32>, vector<64x128xf32>, vector<16x128xf32> -> vector<16x128xf32>
    %84 = arith.addf %80, %83 : vector<16x128xf32>
    %c2_58 = arith.constant 2 : index
    %c0_59 = arith.constant 0 : index
    %c0_60 = arith.constant 0 : index
    %85 = vector.load %arg2[%c2_58, %c0_59, %c0_60] : memref<3x64x128xf32, #tpu.memory_space<vmem>>, vector<1x64x128xf32>
    %86 = vector.shape_cast %85 : vector<1x64x128xf32> to vector<64x128xf32>
    %cst_61 = arith.constant dense<0.000000e+00> : vector<16x128xf32>
    %87 = tpu.matmul %15, %86, %cst_61 {dimension_numbers = #tpu.dot_dimension_numbers<[1], [0], [0], [1], [0, 0, 1, 1], [], []>} : vector<16x64xf32>, vector<64x128xf32>, vector<16x128xf32> -> vector<16x128xf32>
    %88 = arith.addf %84, %87 : vector<16x128xf32>
    %cst_62 = arith.constant 0.000000e+00 : f32
    %89 = vector.broadcast %cst_62 : f32 to vector<16x128xf32>
    %90 = arith.maximumf %88, %89 : vector<16x128xf32>
    %c0_63 = arith.constant 0 : index
    %c0_64 = arith.constant 0 : index
    %c0_65 = arith.constant 0 : index
    %91 = vector.load %arg7[%c0_63, %c0_64, %c0_65] : memref<1x16x128xf32, #tpu.memory_space<vmem>>, vector<1x16x128xf32>
    %92 = vector.shape_cast %91 : vector<1x16x128xf32> to vector<16x128xf32>
    %93 = vector.shape_cast %90 : vector<16x128xf32> to vector<1x16x128xf32>
    tpu.vector_store %arg7[%c0_63, %c0_64, %c0_65], %93 {strides = array<i32>} : memref<1x16x128xf32, #tpu.memory_space<vmem>>, vector<1x16x128xf32>,
    return
  }
  func.func @transform_0(%arg0: i32) -> (i32, i32, i32) {
    %c0_i32 = arith.constant 0 : i32
    %c0_i32_0 = arith.constant 0 : i32
    %c0_i32_1 = arith.constant 0 : i32
    return %arg0, %c0_i32, %c0_i32_0 : i32, i32, i32
  }
  func.func @transform_1(%arg0: i32) -> (i32, i32, i32) {
    %c0_i32 = arith.constant 0 : i32
    %c0_i32_0 = arith.constant 0 : i32
    %c0_i32_1 = arith.constant 0 : i32
    %c0_i32_2 = arith.constant 0 : i32
    return %c0_i32, %c0_i32_0, %c0_i32_1 : i32, i32, i32
  }
  func.func @transform_2(%arg0: i32) -> (i32, i32, i32) {
    %c0_i32 = arith.constant 0 : i32
    %c0_i32_0 = arith.constant 0 : i32
    %c0_i32_1 = arith.constant 0 : i32
    %c0_i32_2 = arith.constant 0 : i32
    return %c0_i32, %c0_i32_0, %c0_i32_1 : i32, i32, i32
  }
  func.func @transform_3(%arg0: i32) -> (i32, i32, i32) {
    %c0_i32 = arith.constant 0 : i32
    %c0_i32_0 = arith.constant 0 : i32
    %c0_i32_1 = arith.constant 0 : i32
    %c0_i32_2 = arith.constant 0 : i32
    return %c0_i32, %c0_i32_0, %c0_i32_1 : i32, i32, i32
  }
  func.func @transform_4(%arg0: i32) -> (i32, i32, i32) {
    %c0_i32 = arith.constant 0 : i32
    %c0_i32_0 = arith.constant 0 : i32
    %c0_i32_1 = arith.constant 0 : i32
    %c0_i32_2 = arith.constant 0 : i32
    return %c0_i32, %c0_i32_0, %c0_i32_1 : i32, i32, i32
  }
  func.func @transform_5(%arg0: i32) -> (i32, i32) {
    %c0_i32 = arith.constant 0 : i32
    %c0_i32_0 = arith.constant 0 : i32
    %c0_i32_1 = arith.constant 0 : i32
    return %c0_i32, %c0_i32_0 : i32, i32
  }
  func.func @transform_6(%arg0: i32) -> (i32, i32, i32) {
    %c0_i32 = arith.constant 0 : i32
    %c0_i32_0 = arith.constant 0 : i32
    %c0_i32_1 = arith.constant 0 : i32
    return %arg0, %c0_i32, %c0_i32_0 : i32, i32, i32
  }
}

</mosaic_0001>

<llo_original>
// kernel: tile.26
$region0: #{tile.26}
  #allocation0 [shape = 's32[1]{0}', space=sflag, size = 0x4, scoped, tag = 'scoped memory for tile.26']
  %s0 = inlined_call_operand.vmem [shape: f32[8], index: 0, kind: input, shape index: {}]
  %s1 = inlined_call_operand.vmem [shape: f32[16,8], index: 1, kind: output, shape index: {}]
  // Predicated region
  $region2: #{tile.26} parent=0 // pred_check
    _
  $region3: #{tile.26} parent=0 // pred_check_branch
    %3 = sbr.rel (0) target = $region5
  $region4: #{tile.26} parent=0 // pred_region
    _
  $region5: #{tile.26} parent=0 // pred_fallthru
    _
  %v4 = vld [vmem:[%s0] ss:$0 sm:$0xff]
  %5 = vst [vmem:[%s1] sm:$0xff] %v4
  %s6 = scalar_lea.vmem %s1, 8
  %7 = vst [vmem:[%s6] sm:$0xff] %v4

// kernel: tile.29
$region0: #{tile.29}
  %s0 = inlined_call_operand.vmem [shape: f32[16,8], index: 0, kind: input, shape index: {}]
  %s1 = inlined_call_operand.vmem [shape: f32[1,128], index: 1, kind: output, shape index: {}]
  $region1: #{tile.29} parent=0
    #allocation0 [shape = 'u8[4096]{0}', space=vmem, size = 0x1000, scoped, tag = 'scoped mem for output reshape']
    %v2 = vld [vmem:[%s0] sm:$0x1]
    %vm3 = vcmask 64512
    %4 = vst.msk [vmem:[#allocation0] sm:$0x1] %vm3, %v2
    %s5 = scalar_lea.vmem %s0, 15
    %v6 = vld [vmem:[%s5] sm:$0x1]
    %7 = vrot.lane.b32.xlu0 %v6, 120
    %v8 = vpop.permute.xlu0 %7
    %vm9 = vcmask 1048512
    %10 = vst.msk [vmem:[#allocation0] sm:$0x1] %vm9, %v8
    %s11 = scalar_lea.vmem %s0, 14
    %v12 = vld [vmem:[%s11] sm:$0x1]
    %13 = vrot.lane.b32.xlu0 %v12, 112
    %v14 = vpop.permute.xlu0 %13
    %vm15 = vcmask 982912
    %16 = vst.msk [vmem:[#allocation0] sm:$0x1] %vm15, %v14
    %s17 = scalar_lea.vmem %s0, 13
    %v18 = vld [vmem:[%s17] sm:$0x1]
    %19 = vrot.lane.b32.xlu0 %v18, 104
    %v20 = vpop.permute.xlu0 %19
    %vm21 = vcmask 917312
    %22 = vst.msk [vmem:[#allocation0] sm:$0x1] %vm21, %v20
    %s23 = scalar_lea.vmem %s0, 12
    %v24 = vld [vmem:[%s23] sm:$0x1]
    %25 = vrot.lane.b32.xlu0 %v24, 96
    %v26 = vpop.permute.xlu0 %25
    %vm27 = vcmask 851712
    %28 = vst.msk [vmem:[#allocation0] sm:$0x1] %vm27, %v26
    %s29 = scalar_lea.vmem %s0, 11
    %v30 = vld [vmem:[%s29] sm:$0x1]
    %31 = vrot.lane.b32.xlu0 %v30, 88
    %v32 = vpop.permute.xlu0 %31
    %vm33 = vcmask 786112
    %34 = vst.msk [vmem:[#allocation0] sm:$0x1] %vm33, %v32
    %s35 = scalar_lea.vmem %s0, 10
    %v36 = vld [vmem:[%s35] sm:$0x1]
    %37 = vrot.lane.b32.xlu0 %v36, 80
    %v38 = vpop.permute.xlu0 %37
    %vm39 = vcmask 720512
    %40 = vst.msk [vmem:[#allocation0] sm:$0x1] %vm39, %v38
    %s41 = scalar_lea.vmem %s0, 9
    %v42 = vld [vmem:[%s41] sm:$0x1]
    %43 = vrot.lane.b32.xlu0 %v42, 72
    %v44 = vpop.permute.xlu0 %43
    %vm45 = vcmask 654912
    %46 = vst.msk [vmem:[#allocation0] sm:$0x1] %vm45, %v44
    %s47 = scalar_lea.vmem %s0, 8
    %v48 = vld [vmem:[%s47] sm:$0x1]
    %49 = vrot.lane.b32.xlu0 %v48, 64
    %v50 = vpop.permute.xlu0 %49
    %vm51 = vcmask 589312
    %52 = vst.msk [vmem:[#allocation0] sm:$0x1] %vm51, %v50
    %s53 = scalar_lea.vmem %s0, 7
    %v54 = vld [vmem:[%s53] sm:$0x1]
    %55 = vrot.lane.b32.xlu0 %v54, 56
    %v56 = vpop.permute.xlu0 %55
    %vm57 = vcmask 523712
    %58 = vst.msk [vmem:[#allocation0] sm:$0x1] %vm57, %v56
    %s59 = scalar_lea.vmem %s0, 6
    %v60 = vld [vmem:[%s59] sm:$0x1]
    %61 = vrot.lane.b32.xlu0 %v60, 48
    %v62 = vpop.permute.xlu0 %61
    %vm63 = vcmask 458112
    %64 = vst.msk [vmem:[#allocation0] sm:$0x1] %vm63, %v62
    %s65 = scalar_lea.vmem %s0, 5
    %v66 = vld [vmem:[%s65] sm:$0x1]
    %67 = vrot.lane.b32.xlu0 %v66, 40
    %v68 = vpop.permute.xlu0 %67
    %vm69 = vcmask 392512
    %70 = vst.msk [vmem:[#allocation0] sm:$0x1] %vm69, %v68
    %s71 = scalar_lea.vmem %s0, 4
    %v72 = vld [vmem:[%s71] sm:$0x1]
    %73 = vrot.lane.b32.xlu0 %v72, 32
    %v74 = vpop.permute.xlu0 %73
    %vm75 = vcmask 326912
    %76 = vst.msk [vmem:[#allocation0] sm:$0x1] %vm75, %v74
    %s77 = scalar_lea.vmem %s0, 3
    %v78 = vld [vmem:[%s77] sm:$0x1]
    %79 = vrot.lane.b32.xlu0 %v78, 24
    %v80 = vpop.permute.xlu0 %79
    %vm81 = vcmask 261312
    %82 = vst.msk [vmem:[#allocation0] sm:$0x1] %vm81, %v80
    %s83 = scalar_lea.vmem %s0, 2
    %v84 = vld [vmem:[%s83] sm:$0x1]
    %85 = vrot.lane.b32.xlu0 %v84, 16
    %v86 = vpop.permute.xlu0 %85
    %vm87 = vcmask 195712
    %88 = vst.msk [vmem:[#allocation0] sm:$0x1] %vm87, %v86
    %s89 = scalar_lea.vmem %s0, 1
    %v90 = vld [vmem:[%s89] sm:$0x1]
    %91 = vrot.lane.b32.xlu0 %v90, 8
    %v92 = vpop.permute.xlu0 %91
    %vm93 = vcmask 130112
    %94 = vst.msk [vmem:[#allocation0] sm:$0x1] %vm93, %v92
    %s96 = sshll.u32 1, 1
    %s97 = ssub.s32 %s96, 1
    %v99 = vld [vmem:[#allocation0] sm:%s97]
    %s100 = sshll.u32 1, 1
    %s101 = ssub.s32 %s100, 1
    %102 = vst [vmem:[%s1] sm:%s101] %v99

// kernel: extract_block_forward.1
$region0: #{extract_block_forward.1}
  #allocation0 [shape = 'u32[]', space=smem, size = 0x4, offset = 0x4, fixed_abs, tag = 'smem constant byte address 0x4 - core index']
  #allocation1 [shape = 'u32[144,128]{1,0:T(1,128)}', space=vmem, size = 0x12000, scoped, tag = 'internal scratch']
  %s0 = inlined_call_operand.vmem [shape: f32[2,16,64], index: 0, kind: input, shape index: {}]
  %s1 = inlined_call_operand.vmem [shape: f32[3,64,128], index: 1, kind: input, shape index: {}]
  %s2 = inlined_call_operand.vmem [shape: f32[3,64,128], index: 2, kind: input, shape index: {}]
  %s3 = inlined_call_operand.vmem [shape: f32[3,128,128], index: 3, kind: input, shape index: {}]
  %s4 = inlined_call_operand.vmem [shape: f32[3,128,128], index: 4, kind: input, shape index: {}]
  %s5 = inlined_call_operand.vmem [shape: f32[3,128], index: 5, kind: input, shape index: {}]
  %s6 = inlined_call_operand.vmem [shape: f32[2,16,128], index: 6, kind: output, shape index: {}]
  %s7 = sld [smem:[#allocation0]]
  $region57: #{extract_block_forward.1} parent=0
    _
  %s9 = ssub.s32 1, %s7
  %s10 = scalar_select 0, %s9, %s7
  loop: start=0, step=1, limit=4
  $region2: #{extract_block_forward.1} parent=0 // loop_pre_header
    _
  $region3: #{extract_block_forward.1} parent=0 // loop_header
    %s12 = sphi 0, %s16
    %p13 = scmp.ge.s32.totalorder %s12, 4
    %s22 = sphi 0, %s24
    %s25 = sphi 0, %s22
    %s26 = sphi 0, %s25
    %s42 = sphi 0, %s26
    %s46 = sphi 0, %s46
    %s48 = sphi 0, %s46
    %s49 = sphi 0, %s48
    %s63 = sphi 0, %s49
    %s67 = sphi 0, %s67
    %s69 = sphi 0, %s67
    %s70 = sphi 0, %s69
    %s84 = sphi 0, %s70
    %s88 = sphi 0, %s88
    %s90 = sphi 0, %s88
    %s91 = sphi 0, %s90
    %s105 = sphi 0, %s91
    %s109 = sphi 0, %s109
    %s111 = sphi 0, %s109
    %s112 = sphi 0, %s111
    %s126 = sphi 0, %s112
    %s130 = sphi 0, %s130
    %s132 = sphi 0, %s130
    %s133 = sphi 0, %s132
    %s147 = sphi 0, %s133
    %s153 = sphi 0, %s155
    %s156 = sphi 0, %s153
    %s157 = sphi 0, %s156
    %s173 = sphi 0, %s157
  $region4: #{extract_block_forward.1} parent=0 // loop_header_branch
    %15 = sbr.rel (%p13) target = $region8
  $region5: #{extract_block_forward.1} parent=0 // loop_body
    %s17 = ssub.s32 %s12, 1
    %s18 = ssub.s32 %s12, 2
    %s19 = sadd.s32 %s12, 1
    %s20 = ssub.s32 %s12, %s19
    %p21 = scmp.eq.s32.totalorder %s20, 0
    %s23 = sadd.s32 %s22, 1
    %s24 = scalar_select %p21, %s22, %s23
    %p27 = pneg %p21
    %p28 = scmp.eq.s32.totalorder %s12, 1
    %p29 = por %p27, %p28
    %p30 = scmp.ne.s32.totalorder %s22, %s25
    %p31 = scmp.eq.s32.totalorder %s12, 0
    %p32 = por %p30, %p31
    %p33 = scmp.ne.s32.totalorder %s22, %s25
    %p34 = scmp.eq.s32.totalorder %s17, 1
    %p35 = por %p33, %p34
    %p36 = scmp.ne.s32.totalorder %s25, %s26
    %p37 = scmp.eq.s32.totalorder %s17, 0
    %p38 = por %p36, %p37
    %p39 = scmp.ne.s32.totalorder %s25, %s26
    %p40 = scmp.eq.s32.totalorder %s18, 1
    %p41 = por %p39, %p40
    %p43 = scmp.ne.s32.totalorder %s26, %s42
    %p44 = scmp.eq.s32.totalorder %s18, 0
    %p45 = por %p43, %p44
    %s47 = sadd.s32 %s46, 1
    %p50 = scmp.eq.s32.totalorder %s12, 1
    %p51 = scmp.ne.s32.totalorder %s46, %s48
    %p52 = scmp.eq.s32.totalorder %s12, 0
    %p53 = por %p51, %p52
    %p54 = scmp.ne.s32.totalorder %s46, %s48
    %p55 = scmp.eq.s32.totalorder %s17, 1
    %p56 = por %p54, %p55
    %p57 = scmp.ne.s32.totalorder %s48, %s49
    %p58 = scmp.eq.s32.totalorder %s17, 0
    %p59 = por %p57, %p58
    %p60 = scmp.ne.s32.totalorder %s48, %s49
    %p61 = scmp.eq.s32.totalorder %s18, 1
    %p62 = por %p60, %p61
    %p64 = scmp.ne.s32.totalorder %s49, %s63
    %p65 = scmp.eq.s32.totalorder %s18, 0
    %p66 = por %p64, %p65
    %s68 = sadd.s32 %s67, 1
    %p71 = scmp.eq.s32.totalorder %s12, 1
    %p72 = scmp.ne.s32.totalorder %s67, %s69
    %p73 = scmp.eq.s32.totalorder %s12, 0
    %p74 = por %p72, %p73
    %p75 = scmp.ne.s32.totalorder %s67, %s69
    %p76 = scmp.eq.s32.totalorder %s17, 1
    %p77 = por %p75, %p76
    %p78 = scmp.ne.s32.totalorder %s69, %s70
    %p79 = scmp.eq.s32.totalorder %s17, 0
    %p80 = por %p78, %p79
    %p81 = scmp.ne.s32.totalorder %s69, %s70
    %p82 = scmp.eq.s32.totalorder %s18, 1
    %p83 = por %p81, %p82
    %p85 = scmp.ne.s32.totalorder %s70, %s84
    %p86 = scmp.eq.s32.totalorder %s18, 0
    %p87 = por %p85, %p86
    %s89 = sadd.s32 %s88, 1
    %p92 = scmp.eq.s32.totalorder %s12, 1
    %p93 = scmp.ne.s32.totalorder %s88, %s90
    %p94 = scmp.eq.s32.totalorder %s12, 0
    %p95 = por %p93, %p94
    %p96 = scmp.ne.s32.totalorder %s88, %s90
    %p97 = scmp.eq.s32.totalorder %s17, 1
    %p98 = por %p96, %p97
    %p99 = scmp.ne.s32.totalorder %s90, %s91
    %p100 = scmp.eq.s32.totalorder %s17, 0
    %p101 = por %p99, %p100
    %p102 = scmp.ne.s32.totalorder %s90, %s91
    %p103 = scmp.eq.s32.totalorder %s18, 1
    %p104 = por %p102, %p103
    %p106 = scmp.ne.s32.totalorder %s91, %s105
    %p107 = scmp.eq.s32.totalorder %s18, 0
    %p108 = por %p106, %p107
    %s110 = sadd.s32 %s109, 1
    %p113 = scmp.eq.s32.totalorder %s12, 1
    %p114 = scmp.ne.s32.totalorder %s109, %s111
    %p115 = scmp.eq.s32.totalorder %s12, 0
    %p116 = por %p114, %p115
    %p117 = scmp.ne.s32.totalorder %s109, %s111
    %p118 = scmp.eq.s32.totalorder %s17, 1
    %p119 = por %p117, %p118
    %p120 = scmp.ne.s32.totalorder %s111, %s112
    %p121 = scmp.eq.s32.totalorder %s17, 0
    %p122 = por %p120, %p121
    %p123 = scmp.ne.s32.totalorder %s111, %s112
    %p124 = scmp.eq.s32.totalorder %s18, 1
    %p125 = por %p123, %p124
    %p127 = scmp.ne.s32.totalorder %s112, %s126
    %p128 = scmp.eq.s32.totalorder %s18, 0
    %p129 = por %p127, %p128
    %s131 = sadd.s32 %s130, 1
    %p134 = scmp.eq.s32.totalorder %s12, 1
    %p135 = scmp.ne.s32.totalorder %s130, %s132
    %p136 = scmp.eq.s32.totalorder %s12, 0
    %p137 = por %p135, %p136
    %p138 = scmp.ne.s32.totalorder %s130, %s132
    %p139 = scmp.eq.s32.totalorder %s17, 1
    %p140 = por %p138, %p139
    %p141 = scmp.ne.s32.totalorder %s132, %s133
    %p142 = scmp.eq.s32.totalorder %s17, 0
    %p143 = por %p141, %p142
    %p144 = scmp.ne.s32.totalorder %s132, %s133
    %p145 = scmp.eq.s32.totalorder %s18, 1
    %p146 = por %p144, %p145
    %p148 = scmp.ne.s32.totalorder %s133, %s147
    %p149 = scmp.eq.s32.totalorder %s18, 0
    %p150 = por %p148, %p149
    %s151 = ssub.s32 %s12, %s19
    %p152 = scmp.eq.s32.totalorder %s151, 0
    %s154 = sadd.s32 %s153, 1
    %s155 = scalar_select %p152, %s153, %s154
    %p158 = pneg %p152
    %p159 = scmp.eq.s32.totalorder %s12, 1
    %p160 = por %p158, %p159
    %p161 = scmp.ne.s32.totalorder %s153, %s156
    %p162 = scmp.eq.s32.totalorder %s12, 0
    %p163 = por %p161, %p162
    %p164 = scmp.ne.s32.totalorder %s153, %s156
    %p165 = scmp.eq.s32.totalorder %s17, 1
    %p166 = por %p164, %p165
    %p167 = scmp.ne.s32.totalorder %s156, %s157
    %p168 = scmp.eq.s32.totalorder %s17, 0
    %p169 = por %p167, %p168
    %p170 = scmp.ne.s32.totalorder %s156, %s157
    %p171 = scmp.eq.s32.totalorder %s18, 1
    %p172 = por %p170, %p171
    %p174 = scmp.ne.s32.totalorder %s157, %s173
    %p175 = scmp.eq.s32.totalorder %s18, 0
    %p176 = por %p174, %p175
    %p177 = scmp.le.s32.totalorder 1, %s12
    %p178 = scmp.lt.s32.totalorder %s12, 3
    %p179 = pnand %p177, %p178
    %p180 = pneg %p179
    // Predicated region
    $region9: #{extract_block_forward.1} parent=5 // pred_check
      _
    $region10: #{extract_block_forward.1} parent=5 // pred_check_branch
      %182 = sbr.rel (%p179) target = $region12
    $region11: #{extract_block_forward.1} parent=5 // pred_region
      %s183 = ssub.s32 %s12, 1
      // Predicated region
      $region13: #{extract_block_forward.1} parent=11 // pred_check
        %p184 = pneg %p59
      $region14: #{extract_block_forward.1} parent=11 // pred_check_branch
        %186 = sbr.rel (%p184) target = $region16
      $region15: #{extract_block_forward.1} parent=11 // pred_region
        _
      $region16: #{extract_block_forward.1} parent=11 // pred_fallthru
        _
      // Predicated region
      $region17: #{extract_block_forward.1} parent=11 // pred_check
        %p187 = pneg %p80
      $region18: #{extract_block_forward.1} parent=11 // pred_check_branch
        %189 = sbr.rel (%p187) target = $region20
      $region19: #{extract_block_forward.1} parent=11 // pred_region
        _
      $region20: #{extract_block_forward.1} parent=11 // pred_fallthru
        _
      // Predicated region
      $region21: #{extract_block_forward.1} parent=11 // pred_check
        %p190 = pneg %p101
      $region22: #{extract_block_forward.1} parent=11 // pred_check_branch
        %192 = sbr.rel (%p190) target = $region24
      $region23: #{extract_block_forward.1} parent=11 // pred_region
        _
      $region24: #{extract_block_forward.1} parent=11 // pred_fallthru
        _
      // Predicated region
      $region25: #{extract_block_forward.1} parent=11 // pred_check
        %p193 = pneg %p122
      $region26: #{extract_block_forward.1} parent=11 // pred_check_branch
        %195 = sbr.rel (%p193) target = $region28
      $region27: #{extract_block_forward.1} parent=11 // pred_region
        _
      $region28: #{extract_block_forward.1} parent=11 // pred_fallthru
        _
      // Predicated region
      $region29: #{extract_block_forward.1} parent=11 // pred_check
        %p196 = pneg %p143
      $region30: #{extract_block_forward.1} parent=11 // pred_check_branch
        %198 = sbr.rel (%p196) target = $region32
      $region31: #{extract_block_forward.1} parent=11 // pred_region
        _
      $region32: #{extract_block_forward.1} parent=11 // pred_fallthru
        _
    $region12: #{extract_block_forward.1} parent=5 // pred_fallthru
      _
    %p199 = scmp.lt.s32.totalorder %s12, 2
    // Predicated region
    $region33: #{extract_block_forward.1} parent=5 // pred_check
      %p200 = pneg %p199
    $region34: #{extract_block_forward.1} parent=5 // pred_check_branch
      %202 = sbr.rel (%p200) target = $region36
    $region35: #{extract_block_forward.1} parent=5 // pred_region
      // Predicated region
      $region37: #{extract_block_forward.1} parent=35 // pred_check
        %p203 = pneg %p32
      $region38: #{extract_block_forward.1} parent=35 // pred_check_branch
        %205 = sbr.rel (%p203) target = $region40
      $region39: #{extract_block_forward.1} parent=35 // pred_region
        %p206 = scmp.lt.s32.totalorder %s12, 1
        %s207 = scalar_select %p206, %s12, 1
        %s208 = smul.addr %s207, 2
        %s209 = smul.addr %s208, 8
        %s210 = scalar_lea.vmem %s0, %s209
      $region40: #{extract_block_forward.1} parent=35 // pred_fallthru
        _
    $region36: #{extract_block_forward.1} parent=5 // pred_fallthru
      _
    %p211 = scmp.le.s32.totalorder 1, %s12
    %p212 = scmp.lt.s32.totalorder %s12, 3
    %p213 = pnand %p211, %p212
    %p214 = pneg %p213
    // Predicated region
    $region41: #{extract_block_forward.1} parent=5 // pred_check
      _
    $region42: #{extract_block_forward.1} parent=5 // pred_check_branch
      %216 = sbr.rel (%p213) target = $region44
    $region43: #{extract_block_forward.1} parent=5 // pred_region
      %s217 = ssub.s32 %s12, 1
      %p218 = scmp.lt.s32.totalorder %s17, 1
      %s219 = scalar_select %p218, %s17, 1
      %s220 = smul.addr %s219, 2
      %s221 = smul.addr %s220, 8
      %s222 = scalar_lea.vmem %s0, %s221
      %p223 = pneg %p38
      %p224 = pneg %p35
      %p225 = pneg %p59
      %p226 = pneg %p56
      %p227 = pneg %p80
      %p228 = pneg %p77
      %p229 = pneg %p101
      %p230 = pneg %p98
      %p231 = pneg %p122
      %p232 = pneg %p119
      %p233 = pneg %p143
      %p234 = pneg %p140
      %p235 = pneg %p169
      %p236 = pneg %p166
      %p237 = scmp.lt.s32.totalorder %s17, 1
      %s238 = scalar_select %p237, %s17, 1
      %s239 = smul.addr %s238, 2
      %s240 = smul.addr %s239, 8
      %s241 = scalar_lea.vmem %s6, %s240
      %p242 = scmp.lt.s32.totalorder %s17, 1
      %s243 = scalar_select %p242, %s17, 1
      %s244 = smul.addr %s243, 2
      %s245 = smul.addr %s244, 8
      %s246 = scalar_lea.vmem %s0, %s245
      %p247 = scmp.lt.s32.totalorder %s17, 1
      %s248 = scalar_select %p247, %s17, 1
      %s249 = smul.addr %s248, 2
      %s250 = smul.addr %s249, 8
      %s251 = scalar_lea.vmem %s6, %s250
      %v252 = vlaneseq
      %v253 = vshrl.u32 %v252, 7
      %v254 = vadd.s32 %v253, 8
      %v255 = vlaneseq
      %v256 = vand.u32 %v255, 127
      %v257 = vsub.s32 %v253, 1
      %v258 = vsub.s32 %v254, 1
      %vm259 = vcmp.eq.s32.totalorder %v256, %v257
      %vm260 = vcmp.eq.s32.totalorder %v256, %v258
      %v261 = vsel %vm259, 1, 0
      %v262 = vsel %vm260, 1, 0
      %v263 = vcvt.s32.f32 %v261
      %v264 = vcvt.s32.f32 %v262
      %v265 = vadd.s32 %v253, 1
      %v266 = vadd.s32 %v254, 1
      %vm267 = vcmp.eq.s32.totalorder %v256, %v265
      %vm268 = vcmp.eq.s32.totalorder %v256, %v266
      %v269 = vsel %vm267, 1, 0
      %v270 = vsel %vm268, 1, 0
      %v271 = vcvt.s32.f32 %v269
      %v272 = vcvt.s32.f32 %v270
      %v273 = vld [vmem:[%s246] sm:$0xff]
      %v274 = vld [vmem:[%s246 + $0x8] sm:$0xff]
      %vm275 = vcmask 130048
      %v277 = vsel %vm275, %v263, 0
      %v280 = vsel %vm275, %v264, 0
      %282 = vmatprep.subr.mxu0 0.0
      %283 = vmatpush1.msra.mxu0 0.0
      %284 = vmatprep.subr.mxu0 0.0
      %285 = vmatpush1.msra.mxu0 0.0
      %286 = vmatprep.subr.mxu0 0.0
      %287 = vmatpush1.msra.mxu0 0.0
      %288 = vmatprep.subr.mxu0 0.0
      %289 = vmatpush1.msra.mxu0 0.0
      %290 = vmatprep.subr.mxu0 0.0
      %291 = vmatpush1.msra.mxu0 0.0
      %292 = vmatprep.subr.mxu0 0.0
      %293 = vmatpush1.msra.mxu0 0.0
      %294 = vmatprep.subr.mxu0 0.0
      %295 = vmatpush1.msra.mxu0 0.0
      %296 = vmatprep.subr.mxu0 0.0
      %297 = vmatpush1.msra.mxu0 0.0
      %298 = vmatprep.subr.mxu0 0.0
      %299 = vmatpush1.msra.mxu0 0.0
      %300 = vmatprep.subr.mxu0 0.0
      %301 = vmatpush1.msra.mxu0 0.0
      %302 = vmatprep.subr.mxu0 0.0
      %303 = vmatpush1.msra.mxu0 0.0
      %304 = vmatprep.subr.mxu0 0.0
      %305 = vmatpush1.msra.mxu0 0.0
      %306 = vmatprep.subr.mxu0 0.0
      %307 = vmatpush1.msra.mxu0 0.0
      %308 = vmatprep.subr.mxu0 0.0
      %309 = vmatpush1.msra.mxu0 0.0
      %310 = vmatprep.subr.mxu0 0.0
      %311 = vmatpush1.msra.mxu0 %v274
      %312 = vmatprep.subr.mxu0 0.0
      %313 = vmatpush1.msra.mxu0 %v273
      %314 = vmatprep.subr.mxu0 0.0
      %315 = vmatpush2.msra.mxu0 0.0
      %316 = vmatprep.subr.mxu0 0.0
      %317 = vmatpush2.msra.mxu0 0.0
      %318 = vmatprep.subr.mxu0 0.0
      %319 = vmatpush2.msra.mxu0 0.0
      %320 = vmatprep.subr.mxu0 0.0
      %321 = vmatpush2.msra.mxu0 0.0
      %322 = vmatprep.subr.mxu0 0.0
      %323 = vmatpush2.msra.mxu0 0.0
      %324 = vmatprep.subr.mxu0 0.0
      %325 = vmatpush2.msra.mxu0 0.0
      %326 = vmatprep.subr.mxu0 0.0
      %327 = vmatpush2.msra.mxu0 0.0
      %328 = vmatprep.subr.mxu0 0.0
      %329 = vmatpush2.msra.mxu0 0.0
      %330 = vmatprep.subr.mxu0 0.0
      %331 = vmatpush2.msra.mxu0 0.0
      %332 = vmatprep.subr.mxu0 0.0
      %333 = vmatpush2.msra.mxu0 0.0
      %334 = vmatprep.subr.mxu0 0.0
      %335 = vmatpush2.msra.mxu0 0.0
      %336 = vmatprep.subr.mxu0 0.0
      %337 = vmatpush2.msra.mxu0 0.0
      %338 = vmatprep.subr.mxu0 0.0
      %339 = vmatpush2.msra.mxu0 0.0
      %340 = vmatprep.subr.mxu0 0.0
      %341 = vmatpush2.msra.mxu0 0.0
      %342 = vmatprep.subr.mxu0 0.0
      %343 = vmatpush2.msra.mxu0 0.0
      %344 = vmatprep.subr.mxu0 0.0
      %345 = vmatpush2.msra.mxu0 0.0
      %346 = vmatprep.mubr.f32.mxu0 0.0
      %347 = vmatmul.mubr.f32.gmra.mxu0 %v277
      %v348 = vpop.f32.mrf.mxu0
      %v349 = vadd.f32 0.0, %v348
      %v350 = vpop.f32.mrf.mxu0
      %351 = vmatprep.mubr.f32.mxu0 0.0
      %352 = vmatmul.mubr.f32.gmra.mxu0 %v280
      %v353 = vpop.f32.mrf.mxu0
      %v354 = vadd.f32 0.0, %v353
      %v355 = vpop.f32.mrf.mxu0
      %356 = vdwg.mxu0
      %v358 = vsel %vm275, %v271, 0
      %v361 = vsel %vm275, %v272, 0
      %363 = vmatprep.subr.mxu0 0.0
      %364 = vmatpush1.msra.mxu0 0.0
      %365 = vmatprep.subr.mxu0 0.0
      %366 = vmatpush1.msra.mxu0 0.0
      %367 = vmatprep.subr.mxu0 0.0
      %368 = vmatpush1.msra.mxu0 0.0
      %369 = vmatprep.subr.mxu0 0.0
      %370 = vmatpush1.msra.mxu0 0.0
      %371 = vmatprep.subr.mxu0 0.0
      %372 = vmatpush1.msra.mxu0 0.0
      %373 = vmatprep.subr.mxu0 0.0
      %374 = vmatpush1.msra.mxu0 0.0
      %375 = vmatprep.subr.mxu0 0.0
      %376 = vmatpush1.msra.mxu0 0.0
      %377 = vmatprep.subr.mxu0 0.0
      %378 = vmatpush1.msra.mxu0 0.0
      %379 = vmatprep.subr.mxu0 0.0
      %380 = vmatpush1.msra.mxu0 0.0
      %381 = vmatprep.subr.mxu0 0.0
      %382 = vmatpush1.msra.mxu0 0.0
      %383 = vmatprep.subr.mxu0 0.0
      %384 = vmatpush1.msra.mxu0 0.0
      %385 = vmatprep.subr.mxu0 0.0
      %386 = vmatpush1.msra.mxu0 0.0
      %387 = vmatprep.subr.mxu0 0.0
      %388 = vmatpush1.msra.mxu0 0.0
      %389 = vmatprep.subr.mxu0 0.0
      %390 = vmatpush1.msra.mxu0 0.0
      %391 = vmatprep.subr.mxu0 0.0
      %392 = vmatpush1.msra.mxu0 %v274
      %393 = vmatprep.subr.mxu0 0.0
      %394 = vmatpush1.msra.mxu0 %v273
      %395 = vmatprep.subr.mxu0 0.0
      %396 = vmatpush2.msra.mxu0 0.0
      %397 = vmatprep.subr.mxu0 0.0
      %398 = vmatpush2.msra.mxu0 0.0
      %399 = vmatprep.subr.mxu0 0.0
      %400 = vmatpush2.msra.mxu0 0.0
      %401 = vmatprep.subr.mxu0 0.0
      %402 = vmatpush2.msra.mxu0 0.0
      %403 = vmatprep.subr.mxu0 0.0
      %404 = vmatpush2.msra.mxu0 0.0
      %405 = vmatprep.subr.mxu0 0.0
      %406 = vmatpush2.msra.mxu0 0.0
      %407 = vmatprep.subr.mxu0 0.0
      %408 = vmatpush2.msra.mxu0 0.0
      %409 = vmatprep.subr.mxu0 0.0
      %410 = vmatpush2.msra.mxu0 0.0
      %411 = vmatprep.subr.mxu0 0.0
      %412 = vmatpush2.msra.mxu0 0.0
      %413 = vmatprep.subr.mxu0 0.0
      %414 = vmatpush2.msra.mxu0 0.0
      %415 = vmatprep.subr.mxu0 0.0
      %416 = vmatpush2.msra.mxu0 0.0
      %417 = vmatprep.subr.mxu0 0.0
      %418 = vmatpush2.msra.mxu0 0.0
      %419 = vmatprep.subr.mxu0 0.0
      %420 = vmatpush2.msra.mxu0 0.0
      %421 = vmatprep.subr.mxu0 0.0
      %422 = vmatpush2.msra.mxu0 0.0
      %423 = vmatprep.subr.mxu0 0.0
      %424 = vmatpush2.msra.mxu0 0.0
      %425 = vmatprep.subr.mxu0 0.0
      %426 = vmatpush2.msra.mxu0 0.0
      %427 = vmatprep.mubr.f32.mxu0 0.0
      %428 = vmatmul.mubr.f32.gmra.mxu0 %v358
      %v429 = vpop.f32.mrf.mxu0
      %v430 = vadd.f32 0.0, %v429
      %v431 = vpop.f32.mrf.mxu0
      %432 = vmatprep.mubr.f32.mxu0 0.0
      %433 = vmatmul.mubr.f32.gmra.mxu0 %v361
      %v434 = vpop.f32.mrf.mxu0
      %v435 = vadd.f32 0.0, %v434
      %v436 = vpop.f32.mrf.mxu0
      %437 = vdwg.mxu0
      %v438 = vld [vmem:[%s5] sm:$0x1]
      %v439 = vlaneseq
      %v440 = vshrl.u32 %v439, 7
      %v441 = vsub.s32 0, %v440
      %v442 = vrot.slane %v438, %v441
      %v443 = vld [vmem:[%s2] sm:$0xff]
      %v444 = vld [vmem:[%s2 + $0x8] sm:$0xff]
      %v445 = vld [vmem:[%s2 + $0x10] sm:$0xff]
      %v446 = vld [vmem:[%s2 + $0x18] sm:$0xff]
      %v447 = vld [vmem:[%s2 + $0x20] sm:$0xff]
      %v448 = vld [vmem:[%s2 + $0x28] sm:$0xff]
      %v449 = vld [vmem:[%s2 + $0x30] sm:$0xff]
      %v450 = vld [vmem:[%s2 + $0x38] sm:$0xff]
      %vm451 = vcmask 523264
      %v453 = vsel %vm451, %v349, 0
      %v456 = vsel %vm451, %v354, 0
      %458 = vmatprep.subr.mxu0 0.0
      %459 = vmatpush1.msra.mxu0 0.0
      %460 = vmatprep.subr.mxu0 0.0
      %461 = vmatpush1.msra.mxu0 0.0
      %462 = vmatprep.subr.mxu0 0.0
      %463 = vmatpush1.msra.mxu0 0.0
      %464 = vmatprep.subr.mxu0 0.0
      %465 = vmatpush1.msra.mxu0 0.0
      %466 = vmatprep.subr.mxu0 0.0
      %467 = vmatpush1.msra.mxu0 0.0
      %468 = vmatprep.subr.mxu0 0.0
      %469 = vmatpush1.msra.mxu0 0.0
      %470 = vmatprep.subr.mxu0 0.0
      %471 = vmatpush1.msra.mxu0 0.0
      %472 = vmatprep.subr.mxu0 0.0
      %473 = vmatpush1.msra.mxu0 0.0
      %474 = vmatprep.subr.mxu0 0.0
      %475 = vmatpush1.msra.mxu0 %v450
      %476 = vmatprep.subr.mxu0 0.0
      %477 = vmatpush1.msra.mxu0 %v449
      %478 = vmatprep.subr.mxu0 0.0
      %479 = vmatpush1.msra.mxu0 %v448
      %480 = vmatprep.subr.mxu0 0.0
      %481 = vmatpush1.msra.mxu0 %v447
      %482 = vmatprep.subr.mxu0 0.0
      %483 = vmatpush1.msra.mxu0 %v446
      %484 = vmatprep.subr.mxu0 0.0
      %485 = vmatpush1.msra.mxu0 %v445
      %486 = vmatprep.subr.mxu0 0.0
      %487 = vmatpush1.msra.mxu0 %v444
      %488 = vmatprep.subr.mxu0 0.0
      %489 = vmatpush1.msra.mxu0 %v443
      %490 = vmatprep.subr.mxu0 0.0
      %491 = vmatpush2.msra.mxu0 0.0
      %492 = vmatprep.subr.mxu0 0.0
      %493 = vmatpush2.msra.mxu0 0.0
      %494 = vmatprep.subr.mxu0 0.0
      %495 = vmatpush2.msra.mxu0 0.0
      %496 = vmatprep.subr.mxu0 0.0
      %497 = vmatpush2.msra.mxu0 0.0
      %498 = vmatprep.subr.mxu0 0.0
      %499 = vmatpush2.msra.mxu0 0.0
      %500 = vmatprep.subr.mxu0 0.0
      %501 = vmatpush2.msra.mxu0 0.0
      %502 = vmatprep.subr.mxu0 0.0
      %503 = vmatpush2.msra.mxu0 0.0
      %504 = vmatprep.subr.mxu0 0.0
      %505 = vmatpush2.msra.mxu0 0.0
      %506 = vmatprep.subr.mxu0 0.0
      %507 = vmatpush2.msra.mxu0 0.0
      %508 = vmatprep.subr.mxu0 0.0
      %509 = vmatpush2.msra.mxu0 0.0
      %510 = vmatprep.subr.mxu0 0.0
      %511 = vmatpush2.msra.mxu0 0.0
      %512 = vmatprep.subr.mxu0 0.0
      %513 = vmatpush2.msra.mxu0 0.0
      %514 = vmatprep.subr.mxu0 0.0
      %515 = vmatpush2.msra.mxu0 0.0
      %516 = vmatprep.subr.mxu0 0.0
      %517 = vmatpush2.msra.mxu0 0.0
      %518 = vmatprep.subr.mxu0 0.0
      %519 = vmatpush2.msra.mxu0 0.0
      %520 = vmatprep.subr.mxu0 0.0
      %521 = vmatpush2.msra.mxu0 0.0
      %522 = vmatprep.mubr.f32.mxu0 0.0
      %523 = vmatmul.mubr.f32.gmra.mxu0 %v453
      %v524 = vpop.f32.mrf.mxu0
      %v525 = vadd.f32 0.0, %v524
      %v526 = vpop.f32.mrf.mxu0
      %527 = vmatprep.mubr.f32.mxu0 0.0
      %528 = vmatmul.mubr.f32.gmra.mxu0 %v456
      %v529 = vpop.f32.mrf.mxu0
      %v530 = vadd.f32 0.0, %v529
      %v531 = vpop.f32.mrf.mxu0
      %532 = vdwg.mxu0
      %v533 = vadd.f32 %v442, %v525
      %v534 = vadd.f32 %v442, %v530
      %s535 = scalar_lea.vmem %s2, 64
      %v536 = vld [vmem:[%s535] sm:$0xff]
      %v537 = vld [vmem:[%s535 + $0x8] sm:$0xff]
      %v538 = vld [vmem:[%s535 + $0x10] sm:$0xff]
      %v539 = vld [vmem:[%s535 + $0x18] sm:$0xff]
      %v540 = vld [vmem:[%s535 + $0x20] sm:$0xff]
      %v541 = vld [vmem:[%s535 + $0x28] sm:$0xff]
      %v542 = vld [vmem:[%s535 + $0x30] sm:$0xff]
      %v543 = vld [vmem:[%s535 + $0x38] sm:$0xff]
      %v545 = vsel %vm451, %v273, 0
      %v548 = vsel %vm451, %v274, 0
      %550 = vmatprep.subr.mxu0 0.0
      %551 = vmatpush1.msra.mxu0 0.0
      %552 = vmatprep.subr.mxu0 0.0
      %553 = vmatpush1.msra.mxu0 0.0
      %554 = vmatprep.subr.mxu0 0.0
      %555 = vmatpush1.msra.mxu0 0.0
      %556 = vmatprep.subr.mxu0 0.0
      %557 = vmatpush1.msra.mxu0 0.0
      %558 = vmatprep.subr.mxu0 0.0
      %559 = vmatpush1.msra.mxu0 0.0
      %560 = vmatprep.subr.mxu0 0.0
      %561 = vmatpush1.msra.mxu0 0.0
      %562 = vmatprep.subr.mxu0 0.0
      %563 = vmatpush1.msra.mxu0 0.0
      %564 = vmatprep.subr.mxu0 0.0
      %565 = vmatpush1.msra.mxu0 0.0
      %566 = vmatprep.subr.mxu0 0.0
      %567 = vmatpush1.msra.mxu0 %v543
      %568 = vmatprep.subr.mxu0 0.0
      %569 = vmatpush1.msra.mxu0 %v542
      %570 = vmatprep.subr.mxu0 0.0
      %571 = vmatpush1.msra.mxu0 %v541
      %572 = vmatprep.subr.mxu0 0.0
      %573 = vmatpush1.msra.mxu0 %v540
      %574 = vmatprep.subr.mxu0 0.0
      %575 = vmatpush1.msra.mxu0 %v539
      %576 = vmatprep.subr.mxu0 0.0
      %577 = vmatpush1.msra.mxu0 %v538
      %578 = vmatprep.subr.mxu0 0.0
      %579 = vmatpush1.msra.mxu0 %v537
      %580 = vmatprep.subr.mxu0 0.0
      %581 = vmatpush1.msra.mxu0 %v536
      %582 = vmatprep.subr.mxu0 0.0
      %583 = vmatpush2.msra.mxu0 0.0
      %584 = vmatprep.subr.mxu0 0.0
      %585 = vmatpush2.msra.mxu0 0.0
      %586 = vmatprep.subr.mxu0 0.0
      %587 = vmatpush2.msra.mxu0 0.0
      %588 = vmatprep.subr.mxu0 0.0
      %589 = vmatpush2.msra.mxu0 0.0
      %590 = vmatprep.subr.mxu0 0.0
      %591 = vmatpush2.msra.mxu0 0.0
      %592 = vmatprep.subr.mxu0 0.0
      %593 = vmatpush2.msra.mxu0 0.0
      %594 = vmatprep.subr.mxu0 0.0
      %595 = vmatpush2.msra.mxu0 0.0
      %596 = vmatprep.subr.mxu0 0.0
      %597 = vmatpush2.msra.mxu0 0.0
      %598 = vmatprep.subr.mxu0 0.0
      %599 = vmatpush2.msra.mxu0 0.0
      %600 = vmatprep.subr.mxu0 0.0
      %601 = vmatpush2.msra.mxu0 0.0
      %602 = vmatprep.subr.mxu0 0.0
      %603 = vmatpush2.msra.mxu0 0.0
      %604 = vmatprep.subr.mxu0 0.0
      %605 = vmatpush2.msra.mxu0 0.0
      %606 = vmatprep.subr.mxu0 0.0
      %607 = vmatpush2.msra.mxu0 0.0
      %608 = vmatprep.subr.mxu0 0.0
      %609 = vmatpush2.msra.mxu0 0.0
      %610 = vmatprep.subr.mxu0 0.0
      %611 = vmatpush2.msra.mxu0 0.0
      %612 = vmatprep.subr.mxu0 0.0
      %613 = vmatpush2.msra.mxu0 0.0
      %614 = vmatprep.mubr.f32.mxu0 0.0
      %615 = vmatmul.mubr.f32.gmra.mxu0 %v545
      %v616 = vpop.f32.mrf.mxu0
      %v617 = vadd.f32 0.0, %v616
      %v618 = vpop.f32.mrf.mxu0
      %619 = vmatprep.mubr.f32.mxu0 0.0
      %620 = vmatmul.mubr.f32.gmra.mxu0 %v548
      %v621 = vpop.f32.mrf.mxu0
      %v622 = vadd.f32 0.0, %v621
      %v623 = vpop.f32.mrf.mxu0
      %624 = vdwg.mxu0
      %v625 = vadd.f32 %v533, %v617
      %v626 = vadd.f32 %v534, %v622
      %s627 = scalar_lea.vmem %s2, 128
      %v628 = vld [vmem:[%s627] sm:$0xff]
      %v629 = vld [vmem:[%s627 + $0x8] sm:$0xff]
      %v630 = vld [vmem:[%s627 + $0x10] sm:$0xff]
      %v631 = vld [vmem:[%s627 + $0x18] sm:$0xff]
      %v632 = vld [vmem:[%s627 + $0x20] sm:$0xff]
      %v633 = vld [vmem:[%s627 + $0x28] sm:$0xff]
      %v634 = vld [vmem:[%s627 + $0x30] sm:$0xff]
      %v635 = vld [vmem:[%s627 + $0x38] sm:$0xff]
      %v637 = vsel %vm451, %v430, 0
      %v640 = vsel %vm451, %v435, 0
      %642 = vmatprep.subr.mxu0 0.0
      %643 = vmatpush1.msra.mxu0 0.0
      %644 = vmatprep.subr.mxu0 0.0
      %645 = vmatpush1.msra.mxu0 0.0
      %646 = vmatprep.subr.mxu0 0.0
      %647 = vmatpush1.msra.mxu0 0.0
      %648 = vmatprep.subr.mxu0 0.0
      %649 = vmatpush1.msra.mxu0 0.0
      %650 = vmatprep.subr.mxu0 0.0
      %651 = vmatpush1.msra.mxu0 0.0
      %652 = vmatprep.subr.mxu0 0.0
      %653 = vmatpush1.msra.mxu0 0.0
      %654 = vmatprep.subr.mxu0 0.0
      %655 = vmatpush1.msra.mxu0 0.0
      %656 = vmatprep.subr.mxu0 0.0
      %657 = vmatpush1.msra.mxu0 0.0
      %658 = vmatprep.subr.mxu0 0.0
      %659 = vmatpush1.msra.mxu0 %v635
      %660 = vmatprep.subr.mxu0 0.0
      %661 = vmatpush1.msra.mxu0 %v634
      %662 = vmatprep.subr.mxu0 0.0
      %663 = vmatpush1.msra.mxu0 %v633
      %664 = vmatprep.subr.mxu0 0.0
      %665 = vmatpush1.msra.mxu0 %v632
      %666 = vmatprep.subr.mxu0 0.0
      %667 = vmatpush1.msra.mxu0 %v631
      %668 = vmatprep.subr.mxu0 0.0
      %669 = vmatpush1.msra.mxu0 %v630
      %670 = vmatprep.subr.mxu0 0.0
      %671 = vmatpush1.msra.mxu0 %v629
      %672 = vmatprep.subr.mxu0 0.0
      %673 = vmatpush1.msra.mxu0 %v628
      %674 = vmatprep.subr.mxu0 0.0
      %675 = vmatpush2.msra.mxu0 0.0
      %676 = vmatprep.subr.mxu0 0.0
      %677 = vmatpush2.msra.mxu0 0.0
      %678 = vmatprep.subr.mxu0 0.0
      %679 = vmatpush2.msra.mxu0 0.0
      %680 = vmatprep.subr.mxu0 0.0
      %681 = vmatpush2.msra.mxu0 0.0
      %682 = vmatprep.subr.mxu0 0.0
      %683 = vmatpush2.msra.mxu0 0.0
      %684 = vmatprep.subr.mxu0 0.0
      %685 = vmatpush2.msra.mxu0 0.0
      %686 = vmatprep.subr.mxu0 0.0
      %687 = vmatpush2.msra.mxu0 0.0
      %688 = vmatprep.subr.mxu0 0.0
      %689 = vmatpush2.msra.mxu0 0.0
      %690 = vmatprep.subr.mxu0 0.0
      %691 = vmatpush2.msra.mxu0 0.0
      %692 = vmatprep.subr.mxu0 0.0
      %693 = vmatpush2.msra.mxu0 0.0
      %694 = vmatprep.subr.mxu0 0.0
      %695 = vmatpush2.msra.mxu0 0.0
      %696 = vmatprep.subr.mxu0 0.0
      %697 = vmatpush2.msra.mxu0 0.0
      %698 = vmatprep.subr.mxu0 0.0
      %699 = vmatpush2.msra.mxu0 0.0
      %700 = vmatprep.subr.mxu0 0.0
      %701 = vmatpush2.msra.mxu0 0.0
      %702 = vmatprep.subr.mxu0 0.0
      %703 = vmatpush2.msra.mxu0 0.0
      %704 = vmatprep.subr.mxu0 0.0
      %705 = vmatpush2.msra.mxu0 0.0
      %706 = vmatprep.mubr.f32.mxu0 0.0
      %707 = vmatmul.mubr.f32.gmra.mxu0 %v637
      %v708 = vpop.f32.mrf.mxu0
      %v709 = vadd.f32 0.0, %v708
      %v710 = vpop.f32.mrf.mxu0
      %711 = vmatprep.mubr.f32.mxu0 0.0
      %712 = vmatmul.mubr.f32.gmra.mxu0 %v640
      %v713 = vpop.f32.mrf.mxu0
      %v714 = vadd.f32 0.0, %v713
      %v715 = vpop.f32.mrf.mxu0
      %716 = vdwg.mxu0
      %v717 = vadd.f32 %v625, %v709
      %v718 = vadd.f32 %v626, %v714
      %v719 = vxor.u32 %v717, 2147483648
      %v720 = vxor.u32 %v718, 2147483648
      %v721 = vmul.f32 %v719, 1.442695
      %v722 = vpow.pop %v721
      %v723 = vmul.f32 %v720, 1.442695
      %v724 = vpow.pop %v723
      %v725 = vadd.f32 %v722, 1.0
      %v726 = vadd.f32 %v724, 1.0
      %v727 = vrcp.pop %v725
      %v728 = vmul.f32 1.0, %v727
      %v729 = vrcp.pop %v726
      %v730 = vmul.f32 1.0, %v729
      %v731 = vmul.f32 %v717, %v728
      %v732 = vmul.f32 %v718, %v730
      %733 = vmatprep.subr.mxu0 0.0
      %734 = vmatpush1.msra.mxu0 0.0
      %735 = vmatprep.subr.mxu0 0.0
      %736 = vmatpush1.msra.mxu0 0.0
      %737 = vmatprep.subr.mxu0 0.0
      %738 = vmatpush1.msra.mxu0 0.0
      %739 = vmatprep.subr.mxu0 0.0
      %740 = vmatpush1.msra.mxu0 0.0
      %741 = vmatprep.subr.mxu0 0.0
      %742 = vmatpush1.msra.mxu0 0.0
      %743 = vmatprep.subr.mxu0 0.0
      %744 = vmatpush1.msra.mxu0 0.0
      %745 = vmatprep.subr.mxu0 0.0
      %746 = vmatpush1.msra.mxu0 0.0
      %747 = vmatprep.subr.mxu0 0.0
      %748 = vmatpush1.msra.mxu0 0.0
      %749 = vmatprep.subr.mxu0 0.0
      %750 = vmatpush1.msra.mxu0 0.0
      %751 = vmatprep.subr.mxu0 0.0
      %752 = vmatpush1.msra.mxu0 0.0
      %753 = vmatprep.subr.mxu0 0.0
      %754 = vmatpush1.msra.mxu0 0.0
      %755 = vmatprep.subr.mxu0 0.0
      %756 = vmatpush1.msra.mxu0 0.0
      %757 = vmatprep.subr.mxu0 0.0
      %758 = vmatpush1.msra.mxu0 0.0
      %759 = vmatprep.subr.mxu0 0.0
      %760 = vmatpush1.msra.mxu0 0.0
      %761 = vmatprep.subr.mxu0 0.0
      %762 = vmatpush1.msra.mxu0 %v732
      %763 = vmatprep.subr.mxu0 0.0
      %764 = vmatpush1.msra.mxu0 %v731
      %765 = vmatprep.subr.mxu0 0.0
      %766 = vmatpush2.msra.mxu0 0.0
      %767 = vmatprep.subr.mxu0 0.0
      %768 = vmatpush2.msra.mxu0 0.0
      %769 = vmatprep.subr.mxu0 0.0
      %770 = vmatpush2.msra.mxu0 0.0
      %771 = vmatprep.subr.mxu0 0.0
      %772 = vmatpush2.msra.mxu0 0.0
      %773 = vmatprep.subr.mxu0 0.0
      %774 = vmatpush2.msra.mxu0 0.0
      %775 = vmatprep.subr.mxu0 0.0
      %776 = vmatpush2.msra.mxu0 0.0
      %777 = vmatprep.subr.mxu0 0.0
      %778 = vmatpush2.msra.mxu0 0.0
      %779 = vmatprep.subr.mxu0 0.0
      %780 = vmatpush2.msra.mxu0 0.0
      %781 = vmatprep.subr.mxu0 0.0
      %782 = vmatpush2.msra.mxu0 0.0
      %783 = vmatprep.subr.mxu0 0.0
      %784 = vmatpush2.msra.mxu0 0.0
      %785 = vmatprep.subr.mxu0 0.0
      %786 = vmatpush2.msra.mxu0 0.0
      %787 = vmatprep.subr.mxu0 0.0
      %788 = vmatpush2.msra.mxu0 0.0
      %789 = vmatprep.subr.mxu0 0.0
      %790 = vmatpush2.msra.mxu0 0.0
      %791 = vmatprep.subr.mxu0 0.0
      %792 = vmatpush2.msra.mxu0 0.0
      %793 = vmatprep.subr.mxu0 0.0
      %794 = vmatpush2.msra.mxu0 0.0
      %795 = vmatprep.subr.mxu0 0.0
      %796 = vmatpush2.msra.mxu0 0.0
      %797 = vmatprep.mubr.f32.mxu0 0.0
      %798 = vmatmul.mubr.f32.gmra.mxu0 %v277
      %v799 = vpop.f32.mrf.mxu0
      %v800 = vadd.f32 0.0, %v799
      %v801 = vpop.f32.mrf.mxu0
      %802 = vmatprep.mubr.f32.mxu0 0.0
      %803 = vmatmul.mubr.f32.gmra.mxu0 %v280
      %v804 = vpop.f32.mrf.mxu0
      %v805 = vadd.f32 0.0, %v804
      %v806 = vpop.f32.mrf.mxu0
      %807 = vdwg.mxu0
      %808 = vmatprep.subr.mxu0 0.0
      %809 = vmatpush1.msra.mxu0 0.0
      %810 = vmatprep.subr.mxu0 0.0
      %811 = vmatpush1.msra.mxu0 0.0
      %812 = vmatprep.subr.mxu0 0.0
      %813 = vmatpush1.msra.mxu0 0.0
      %814 = vmatprep.subr.mxu0 0.0
      %815 = vmatpush1.msra.mxu0 0.0
      %816 = vmatprep.subr.mxu0 0.0
      %817 = vmatpush1.msra.mxu0 0.0
      %818 = vmatprep.subr.mxu0 0.0
      %819 = vmatpush1.msra.mxu0 0.0
      %820 = vmatprep.subr.mxu0 0.0
      %821 = vmatpush1.msra.mxu0 0.0
      %822 = vmatprep.subr.mxu0 0.0
      %823 = vmatpush1.msra.mxu0 0.0
      %824 = vmatprep.subr.mxu0 0.0
      %825 = vmatpush1.msra.mxu0 0.0
      %826 = vmatprep.subr.mxu0 0.0
      %827 = vmatpush1.msra.mxu0 0.0
      %828 = vmatprep.subr.mxu0 0.0
      %829 = vmatpush1.msra.mxu0 0.0
      %830 = vmatprep.subr.mxu0 0.0
      %831 = vmatpush1.msra.mxu0 0.0
      %832 = vmatprep.subr.mxu0 0.0
      %833 = vmatpush1.msra.mxu0 0.0
      %834 = vmatprep.subr.mxu0 0.0
      %835 = vmatpush1.msra.mxu0 0.0
      %836 = vmatprep.subr.mxu0 0.0
      %837 = vmatpush1.msra.mxu0 %v732
      %838 = vmatprep.subr.mxu0 0.0
      %839 = vmatpush1.msra.mxu0 %v731
      %840 = vmatprep.subr.mxu0 0.0
      %841 = vmatpush2.msra.mxu0 0.0
      %842 = vmatprep.subr.mxu0 0.0
      %843 = vmatpush2.msra.mxu0 0.0
      %844 = vmatprep.subr.mxu0 0.0
      %845 = vmatpush2.msra.mxu0 0.0
      %846 = vmatprep.subr.mxu0 0.0
      %847 = vmatpush2.msra.mxu0 0.0
      %848 = vmatprep.subr.mxu0 0.0
      %849 = vmatpush2.msra.mxu0 0.0
      %850 = vmatprep.subr.mxu0 0.0
      %851 = vmatpush2.msra.mxu0 0.0
      %852 = vmatprep.subr.mxu0 0.0
      %853 = vmatpush2.msra.mxu0 0.0
      %854 = vmatprep.subr.mxu0 0.0
      %855 = vmatpush2.msra.mxu0 0.0
      %856 = vmatprep.subr.mxu0 0.0
      %857 = vmatpush2.msra.mxu0 0.0
      %858 = vmatprep.subr.mxu0 0.0
      %859 = vmatpush2.msra.mxu0 0.0
      %860 = vmatprep.subr.mxu0 0.0
      %861 = vmatpush2.msra.mxu0 0.0
      %862 = vmatprep.subr.mxu0 0.0
      %863 = vmatpush2.msra.mxu0 0.0
      %864 = vmatprep.subr.mxu0 0.0
      %865 = vmatpush2.msra.mxu0 0.0
      %866 = vmatprep.subr.mxu0 0.0
      %867 = vmatpush2.msra.mxu0 0.0
      %868 = vmatprep.subr.mxu0 0.0
      %869 = vmatpush2.msra.mxu0 0.0
      %870 = vmatprep.subr.mxu0 0.0
      %871 = vmatpush2.msra.mxu0 0.0
      %872 = vmatprep.mubr.f32.mxu0 0.0
      %873 = vmatmul.mubr.f32.gmra.mxu0 %v358
      %v874 = vpop.f32.mrf.mxu0
      %v875 = vadd.f32 0.0, %v874
      %v876 = vpop.f32.mrf.mxu0
      %877 = vmatprep.mubr.f32.mxu0 0.0
      %878 = vmatmul.mubr.f32.gmra.mxu0 %v361
      %v879 = vpop.f32.mrf.mxu0
      %v880 = vadd.f32 0.0, %v879
      %v881 = vpop.f32.mrf.mxu0
      %882 = vdwg.mxu0
      %v883 = vld [vmem:[%s5 + $0x1] sm:$0x1]
      %v884 = vlaneseq
      %v885 = vshrl.u32 %v884, 7
      %v886 = vsub.s32 0, %v885
      %v887 = vrot.slane %v883, %v886
      %v888 = vld [vmem:[%s3] sm:$0xff]
      %v889 = vld [vmem:[%s3 + $0x8] sm:$0xff]
      %v890 = vld [vmem:[%s3 + $0x10] sm:$0xff]
      %v891 = vld [vmem:[%s3 + $0x18] sm:$0xff]
      %v892 = vld [vmem:[%s3 + $0x20] sm:$0xff]
      %v893 = vld [vmem:[%s3 + $0x28] sm:$0xff]
      %v894 = vld [vmem:[%s3 + $0x30] sm:$0xff]
      %v895 = vld [vmem:[%s3 + $0x38] sm:$0xff]
      %v896 = vld [vmem:[%s3 + $0x40] sm:$0xff]
      %v897 = vld [vmem:[%s3 + $0x48] sm:$0xff]
      %v898 = vld [vmem:[%s3 + $0x50] sm:$0xff]
      %v899 = vld [vmem:[%s3 + $0x58] sm:$0xff]
      %v900 = vld [vmem:[%s3 + $0x60] sm:$0xff]
      %v901 = vld [vmem:[%s3 + $0x68] sm:$0xff]
      %v902 = vld [vmem:[%s3 + $0x70] sm:$0xff]
      %v903 = vld [vmem:[%s3 + $0x78] sm:$0xff]
      %904 = vmatprep.subr.mxu0 0.0
      %905 = vmatpush1.msra.mxu0 %v903
      %906 = vmatprep.subr.mxu0 0.0
      %907 = vmatpush1.msra.mxu0 %v902
      %908 = vmatprep.subr.mxu0 0.0
      %909 = vmatpush1.msra.mxu0 %v901
      %910 = vmatprep.subr.mxu0 0.0
      %911 = vmatpush1.msra.mxu0 %v900
      %912 = vmatprep.subr.mxu0 0.0
      %913 = vmatpush1.msra.mxu0 %v899
      %914 = vmatprep.subr.mxu0 0.0
      %915 = vmatpush1.msra.mxu0 %v898
      %916 = vmatprep.subr.mxu0 0.0
      %917 = vmatpush1.msra.mxu0 %v897
      %918 = vmatprep.subr.mxu0 0.0
      %919 = vmatpush1.msra.mxu0 %v896
      %920 = vmatprep.subr.mxu0 0.0
      %921 = vmatpush1.msra.mxu0 %v895
      %922 = vmatprep.subr.mxu0 0.0
      %923 = vmatpush1.msra.mxu0 %v894
      %924 = vmatprep.subr.mxu0 0.0
      %925 = vmatpush1.msra.mxu0 %v893
      %926 = vmatprep.subr.mxu0 0.0
      %927 = vmatpush1.msra.mxu0 %v892
      %928 = vmatprep.subr.mxu0 0.0
      %929 = vmatpush1.msra.mxu0 %v891
      %930 = vmatprep.subr.mxu0 0.0
      %931 = vmatpush1.msra.mxu0 %v890
      %932 = vmatprep.subr.mxu0 0.0
      %933 = vmatpush1.msra.mxu0 %v889
      %934 = vmatprep.subr.mxu0 0.0
      %935 = vmatpush1.msra.mxu0 %v888
      %936 = vmatprep.subr.mxu0 0.0
      %937 = vmatpush2.msra.mxu0 0.0
      %938 = vmatprep.subr.mxu0 0.0
      %939 = vmatpush2.msra.mxu0 0.0
      %940 = vmatprep.subr.mxu0 0.0
      %941 = vmatpush2.msra.mxu0 0.0
      %942 = vmatprep.subr.mxu0 0.0
      %943 = vmatpush2.msra.mxu0 0.0
      %944 = vmatprep.subr.mxu0 0.0
      %945 = vmatpush2.msra.mxu0 0.0
      %946 = vmatprep.subr.mxu0 0.0
      %947 = vmatpush2.msra.mxu0 0.0
      %948 = vmatprep.subr.mxu0 0.0
      %949 = vmatpush2.msra.mxu0 0.0
      %950 = vmatprep.subr.mxu0 0.0
      %951 = vmatpush2.msra.mxu0 0.0
      %952 = vmatprep.subr.mxu0 0.0
      %953 = vmatpush2.msra.mxu0 0.0
      %954 = vmatprep.subr.mxu0 0.0
      %955 = vmatpush2.msra.mxu0 0.0
      %956 = vmatprep.subr.mxu0 0.0
      %957 = vmatpush2.msra.mxu0 0.0
      %958 = vmatprep.subr.mxu0 0.0
      %959 = vmatpush2.msra.mxu0 0.0
      %960 = vmatprep.subr.mxu0 0.0
      %961 = vmatpush2.msra.mxu0 0.0
      %962 = vmatprep.subr.mxu0 0.0
      %963 = vmatpush2.msra.mxu0 0.0
      %964 = vmatprep.subr.mxu0 0.0
      %965 = vmatpush2.msra.mxu0 0.0
      %966 = vmatprep.subr.mxu0 0.0
      %967 = vmatpush2.msra.mxu0 0.0
      %968 = vmatprep.mubr.f32.mxu0 0.0
      %969 = vmatmul.mubr.f32.gmra.mxu0 %v800
      %v970 = vpop.f32.mrf.mxu0
      %v971 = vadd.f32 0.0, %v970
      %v972 = vpop.f32.mrf.mxu0
      %973 = vmatprep.mubr.f32.mxu0 0.0
      %974 = vmatmul.mubr.f32.gmra.mxu0 %v805
      %v975 = vpop.f32.mrf.mxu0
      %v976 = vadd.f32 0.0, %v975
      %v977 = vpop.f32.mrf.mxu0
      %978 = vdwg.mxu0
      %v979 = vadd.f32 %v887, %v971
      %v980 = vadd.f32 %v887, %v976
      %s981 = scalar_lea.vmem %s3, 128
      %v982 = vld [vmem:[%s981] sm:$0xff]
      %v983 = vld [vmem:[%s981 + $0x8] sm:$0xff]
      %v984 = vld [vmem:[%s981 + $0x10] sm:$0xff]
      %v985 = vld [vmem:[%s981 + $0x18] sm:$0xff]
      %v986 = vld [vmem:[%s981 + $0x20] sm:$0xff]
      %v987 = vld [vmem:[%s981 + $0x28] sm:$0xff]
      %v988 = vld [vmem:[%s981 + $0x30] sm:$0xff]
      %v989 = vld [vmem:[%s981 + $0x38] sm:$0xff]
      %v990 = vld [vmem:[%s981 + $0x40] sm:$0xff]
      %v991 = vld [vmem:[%s981 + $0x48] sm:$0xff]
      %v992 = vld [vmem:[%s981 + $0x50] sm:$0xff]
      %v993 = vld [vmem:[%s981 + $0x58] sm:$0xff]
      %v994 = vld [vmem:[%s981 + $0x60] sm:$0xff]
      %v995 = vld [vmem:[%s981 + $0x68] sm:$0xff]
      %v996 = vld [vmem:[%s981 + $0x70] sm:$0xff]
      %v997 = vld [vmem:[%s981 + $0x78] sm:$0xff]
      %998 = vmatprep.subr.mxu0 0.0
      %999 = vmatpush1.msra.mxu0 %v997
      %1000 = vmatprep.subr.mxu0 0.0
      %1001 = vmatpush1.msra.mxu0 %v996
      %1002 = vmatprep.subr.mxu0 0.0
      %1003 = vmatpush1.msra.mxu0 %v995
      %1004 = vmatprep.subr.mxu0 0.0
      %1005 = vmatpush1.msra.mxu0 %v994
      %1006 = vmatprep.subr.mxu0 0.0
      %1007 = vmatpush1.msra.mxu0 %v993
      %1008 = vmatprep.subr.mxu0 0.0
      %1009 = vmatpush1.msra.mxu0 %v992
      %1010 = vmatprep.subr.mxu0 0.0
      %1011 = vmatpush1.msra.mxu0 %v991
      %1012 = vmatprep.subr.mxu0 0.0
      %1013 = vmatpush1.msra.mxu0 %v990
      %1014 = vmatprep.subr.mxu0 0.0
      %1015 = vmatpush1.msra.mxu0 %v989
      %1016 = vmatprep.subr.mxu0 0.0
      %1017 = vmatpush1.msra.mxu0 %v988
      %1018 = vmatprep.subr.mxu0 0.0
      %1019 = vmatpush1.msra.mxu0 %v987
      %1020 = vmatprep.subr.mxu0 0.0
      %1021 = vmatpush1.msra.mxu0 %v986
      %1022 = vmatprep.subr.mxu0 0.0
      %1023 = vmatpush1.msra.mxu0 %v985
      %1024 = vmatprep.subr.mxu0 0.0
      %1025 = vmatpush1.msra.mxu0 %v984
      %1026 = vmatprep.subr.mxu0 0.0
      %1027 = vmatpush1.msra.mxu0 %v983
      %1028 = vmatprep.subr.mxu0 0.0
      %1029 = vmatpush1.msra.mxu0 %v982
      %1030 = vmatprep.subr.mxu0 0.0
      %1031 = vmatpush2.msra.mxu0 0.0
      %1032 = vmatprep.subr.mxu0 0.0
      %1033 = vmatpush2.msra.mxu0 0.0
      %1034 = vmatprep.subr.mxu0 0.0
      %1035 = vmatpush2.msra.mxu0 0.0
      %1036 = vmatprep.subr.mxu0 0.0
      %1037 = vmatpush2.msra.mxu0 0.0
      %1038 = vmatprep.subr.mxu0 0.0
      %1039 = vmatpush2.msra.mxu0 0.0
      %1040 = vmatprep.subr.mxu0 0.0
      %1041 = vmatpush2.msra.mxu0 0.0
      %1042 = vmatprep.subr.mxu0 0.0
      %1043 = vmatpush2.msra.mxu0 0.0
      %1044 = vmatprep.subr.mxu0 0.0
      %1045 = vmatpush2.msra.mxu0 0.0
      %1046 = vmatprep.subr.mxu0 0.0
      %1047 = vmatpush2.msra.mxu0 0.0
      %1048 = vmatprep.subr.mxu0 0.0
      %1049 = vmatpush2.msra.mxu0 0.0
      %1050 = vmatprep.subr.mxu0 0.0
      %1051 = vmatpush2.msra.mxu0 0.0
      %1052 = vmatprep.subr.mxu0 0.0
      %1053 = vmatpush2.msra.mxu0 0.0
      %1054 = vmatprep.subr.mxu0 0.0
      %1055 = vmatpush2.msra.mxu0 0.0
      %1056 = vmatprep.subr.mxu0 0.0
      %1057 = vmatpush2.msra.mxu0 0.0
      %1058 = vmatprep.subr.mxu0 0.0
      %1059 = vmatpush2.msra.mxu0 0.0
      %1060 = vmatprep.subr.mxu0 0.0
      %1061 = vmatpush2.msra.mxu0 0.0
      %1062 = vmatprep.mubr.f32.mxu0 0.0
      %1063 = vmatmul.mubr.f32.gmra.mxu0 %v731
      %v1064 = vpop.f32.mrf.mxu0
      %v1065 = vadd.f32 0.0, %v1064
      %v1066 = vpop.f32.mrf.mxu0
      %1067 = vmatprep.mubr.f32.mxu0 0.0
      %1068 = vmatmul.mubr.f32.gmra.mxu0 %v732
      %v1069 = vpop.f32.mrf.mxu0
      %v1070 = vadd.f32 0.0, %v1069
      %v1071 = vpop.f32.mrf.mxu0
      %1072 = vdwg.mxu0
      %v1073 = vadd.f32 %v979, %v1065
      %v1074 = vadd.f32 %v980, %v1070
      %s1075 = scalar_lea.vmem %s3, 256
      %v1076 = vld [vmem:[%s1075] sm:$0xff]
      %v1077 = vld [vmem:[%s1075 + $0x8] sm:$0xff]
      %v1078 = vld [vmem:[%s1075 + $0x10] sm:$0xff]
      %v1079 = vld [vmem:[%s1075 + $0x18] sm:$0xff]
      %v1080 = vld [vmem:[%s1075 + $0x20] sm:$0xff]
      %v1081 = vld [vmem:[%s1075 + $0x28] sm:$0xff]
      %v1082 = vld [vmem:[%s1075 + $0x30] sm:$0xff]
      %v1083 = vld [vmem:[%s1075 + $0x38] sm:$0xff]
      %v1084 = vld [vmem:[%s1075 + $0x40] sm:$0xff]
      %v1085 = vld [vmem:[%s1075 + $0x48] sm:$0xff]
      %v1086 = vld [vmem:[%s1075 + $0x50] sm:$0xff]
      %v1087 = vld [vmem:[%s1075 + $0x58] sm:$0xff]
      %v1088 = vld [vmem:[%s1075 + $0x60] sm:$0xff]
      %v1089 = vld [vmem:[%s1075 + $0x68] sm:$0xff]
      %v1090 = vld [vmem:[%s1075 + $0x70] sm:$0xff]
      %v1091 = vld [vmem:[%s1075 + $0x78] sm:$0xff]
      %1092 = vmatprep.subr.mxu0 0.0
      %1093 = vmatpush1.msra.mxu0 %v1091
      %1094 = vmatprep.subr.mxu0 0.0
      %1095 = vmatpush1.msra.mxu0 %v1090
      %1096 = vmatprep.subr.mxu0 0.0
      %1097 = vmatpush1.msra.mxu0 %v1089
      %1098 = vmatprep.subr.mxu0 0.0
      %1099 = vmatpush1.msra.mxu0 %v1088
      %1100 = vmatprep.subr.mxu0 0.0
      %1101 = vmatpush1.msra.mxu0 %v1087
      %1102 = vmatprep.subr.mxu0 0.0
      %1103 = vmatpush1.msra.mxu0 %v1086
      %1104 = vmatprep.subr.mxu0 0.0
      %1105 = vmatpush1.msra.mxu0 %v1085
      %1106 = vmatprep.subr.mxu0 0.0
      %1107 = vmatpush1.msra.mxu0 %v1084
      %1108 = vmatprep.subr.mxu0 0.0
      %1109 = vmatpush1.msra.mxu0 %v1083
      %1110 = vmatprep.subr.mxu0 0.0
      %1111 = vmatpush1.msra.mxu0 %v1082
      %1112 = vmatprep.subr.mxu0 0.0
      %1113 = vmatpush1.msra.mxu0 %v1081
      %1114 = vmatprep.subr.mxu0 0.0
      %1115 = vmatpush1.msra.mxu0 %v1080
      %1116 = vmatprep.subr.mxu0 0.0
      %1117 = vmatpush1.msra.mxu0 %v1079
      %1118 = vmatprep.subr.mxu0 0.0
      %1119 = vmatpush1.msra.mxu0 %v1078
      %1120 = vmatprep.subr.mxu0 0.0
      %1121 = vmatpush1.msra.mxu0 %v1077
      %1122 = vmatprep.subr.mxu0 0.0
      %1123 = vmatpush1.msra.mxu0 %v1076
      %1124 = vmatprep.subr.mxu0 0.0
      %1125 = vmatpush2.msra.mxu0 0.0
      %1126 = vmatprep.subr.mxu0 0.0
      %1127 = vmatpush2.msra.mxu0 0.0
      %1128 = vmatprep.subr.mxu0 0.0
      %1129 = vmatpush2.msra.mxu0 0.0
      %1130 = vmatprep.subr.mxu0 0.0
      %1131 = vmatpush2.msra.mxu0 0.0
      %1132 = vmatprep.subr.mxu0 0.0
      %1133 = vmatpush2.msra.mxu0 0.0
      %1134 = vmatprep.subr.mxu0 0.0
      %1135 = vmatpush2.msra.mxu0 0.0
      %1136 = vmatprep.subr.mxu0 0.0
      %1137 = vmatpush2.msra.mxu0 0.0
      %1138 = vmatprep.subr.mxu0 0.0
      %1139 = vmatpush2.msra.mxu0 0.0
      %1140 = vmatprep.subr.mxu0 0.0
      %1141 = vmatpush2.msra.mxu0 0.0
      %1142 = vmatprep.subr.mxu0 0.0
      %1143 = vmatpush2.msra.mxu0 0.0
      %1144 = vmatprep.subr.mxu0 0.0
      %1145 = vmatpush2.msra.mxu0 0.0
      %1146 = vmatprep.subr.mxu0 0.0
      %1147 = vmatpush2.msra.mxu0 0.0
      %1148 = vmatprep.subr.mxu0 0.0
      %1149 = vmatpush2.msra.mxu0 0.0
      %1150 = vmatprep.subr.mxu0 0.0
      %1151 = vmatpush2.msra.mxu0 0.0
      %1152 = vmatprep.subr.mxu0 0.0
      %1153 = vmatpush2.msra.mxu0 0.0
      %1154 = vmatprep.subr.mxu0 0.0
      %1155 = vmatpush2.msra.mxu0 0.0
      %1156 = vmatprep.mubr.f32.mxu0 0.0
      %1157 = vmatmul.mubr.f32.gmra.mxu0 %v875
      %v1158 = vpop.f32.mrf.mxu0
      %v1159 = vadd.f32 0.0, %v1158
      %v1160 = vpop.f32.mrf.mxu0
      %1161 = vmatprep.mubr.f32.mxu0 0.0
      %1162 = vmatmul.mubr.f32.gmra.mxu0 %v880
      %v1163 = vpop.f32.mrf.mxu0
      %v1164 = vadd.f32 0.0, %v1163
      %v1165 = vpop.f32.mrf.mxu0
      %1166 = vdwg.mxu0
      %v1167 = vadd.f32 %v1073, %v1159
      %v1168 = vadd.f32 %v1074, %v1164
      %v1169 = vxor.u32 %v1167, 2147483648
      %v1170 = vxor.u32 %v1168, 2147483648
      %v1171 = vmul.f32 %v1169, 1.442695
      %v1172 = vpow.pop %v1171
      %v1173 = vmul.f32 %v1170, 1.442695
      %v1174 = vpow.pop %v1173
      %v1175 = vadd.f32 %v1172, 1.0
      %v1176 = vadd.f32 %v1174, 1.0
      %v1177 = vrcp.pop %v1175
      %v1178 = vmul.f32 1.0, %v1177
      %v1179 = vrcp.pop %v1176
      %v1180 = vmul.f32 1.0, %v1179
      %v1181 = vmul.f32 %v1167, %v1178
      %v1182 = vmul.f32 %v1168, %v1180
      %1183 = vmatprep.subr.mxu0 0.0
      %1184 = vmatpush1.msra.mxu0 0.0
      %1185 = vmatprep.subr.mxu0 0.0
      %1186 = vmatpush1.msra.mxu0 0.0
      %1187 = vmatprep.subr.mxu0 0.0
      %1188 = vmatpush1.msra.mxu0 0.0
      %1189 = vmatprep.subr.mxu0 0.0
      %1190 = vmatpush1.msra.mxu0 0.0
      %1191 = vmatprep.subr.mxu0 0.0
      %1192 = vmatpush1.msra.mxu0 0.0
      %1193 = vmatprep.subr.mxu0 0.0
      %1194 = vmatpush1.msra.mxu0 0.0
      %1195 = vmatprep.subr.mxu0 0.0
      %1196 = vmatpush1.msra.mxu0 0.0
      %1197 = vmatprep.subr.mxu0 0.0
      %1198 = vmatpush1.msra.mxu0 0.0
      %1199 = vmatprep.subr.mxu0 0.0
      %1200 = vmatpush1.msra.mxu0 0.0
      %1201 = vmatprep.subr.mxu0 0.0
      %1202 = vmatpush1.msra.mxu0 0.0
      %1203 = vmatprep.subr.mxu0 0.0
      %1204 = vmatpush1.msra.mxu0 0.0
      %1205 = vmatprep.subr.mxu0 0.0
      %1206 = vmatpush1.msra.mxu0 0.0
      %1207 = vmatprep.subr.mxu0 0.0
      %1208 = vmatpush1.msra.mxu0 0.0
      %1209 = vmatprep.subr.mxu0 0.0
      %1210 = vmatpush1.msra.mxu0 0.0
      %1211 = vmatprep.subr.mxu0 0.0
      %1212 = vmatpush1.msra.mxu0 %v1182
      %1213 = vmatprep.subr.mxu0 0.0
      %1214 = vmatpush1.msra.mxu0 %v1181
      %1215 = vmatprep.subr.mxu0 0.0
      %1216 = vmatpush2.msra.mxu0 0.0
      %1217 = vmatprep.subr.mxu0 0.0
      %1218 = vmatpush2.msra.mxu0 0.0
      %1219 = vmatprep.subr.mxu0 0.0
      %1220 = vmatpush2.msra.mxu0 0.0
      %1221 = vmatprep.subr.mxu0 0.0
      %1222 = vmatpush2.msra.mxu0 0.0
      %1223 = vmatprep.subr.mxu0 0.0
      %1224 = vmatpush2.msra.mxu0 0.0
      %1225 = vmatprep.subr.mxu0 0.0
      %1226 = vmatpush2.msra.mxu0 0.0
      %1227 = vmatprep.subr.mxu0 0.0
      %1228 = vmatpush2.msra.mxu0 0.0
      %1229 = vmatprep.subr.mxu0 0.0
      %1230 = vmatpush2.msra.mxu0 0.0
      %1231 = vmatprep.subr.mxu0 0.0
      %1232 = vmatpush2.msra.mxu0 0.0
      %1233 = vmatprep.subr.mxu0 0.0
      %1234 = vmatpush2.msra.mxu0 0.0
      %1235 = vmatprep.subr.mxu0 0.0
      %1236 = vmatpush2.msra.mxu0 0.0
      %1237 = vmatprep.subr.mxu0 0.0
      %1238 = vmatpush2.msra.mxu0 0.0
      %1239 = vmatprep.subr.mxu0 0.0
      %1240 = vmatpush2.msra.mxu0 0.0
      %1241 = vmatprep.subr.mxu0 0.0
      %1242 = vmatpush2.msra.mxu0 0.0
      %1243 = vmatprep.subr.mxu0 0.0
      %1244 = vmatpush2.msra.mxu0 0.0
      %1245 = vmatprep.subr.mxu0 0.0
      %1246 = vmatpush2.msra.mxu0 0.0
      %1247 = vmatprep.mubr.f32.mxu0 0.0
      %1248 = vmatmul.mubr.f32.gmra.mxu0 %v277
      %v1249 = vpop.f32.mrf.mxu0
      %v1250 = vadd.f32 0.0, %v1249
      %v1251 = vpop.f32.mrf.mxu0
      %1252 = vmatprep.mubr.f32.mxu0 0.0
      %1253 = vmatmul.mubr.f32.gmra.mxu0 %v280
      %v1254 = vpop.f32.mrf.mxu0
      %v1255 = vadd.f32 0.0, %v1254
      %v1256 = vpop.f32.mrf.mxu0
      %1257 = vdwg.mxu0
      %1258 = vmatprep.subr.mxu0 0.0
      %1259 = vmatpush1.msra.mxu0 0.0
      %1260 = vmatprep.subr.mxu0 0.0
      %1261 = vmatpush1.msra.mxu0 0.0
      %1262 = vmatprep.subr.mxu0 0.0
      %1263 = vmatpush1.msra.mxu0 0.0
      %1264 = vmatprep.subr.mxu0 0.0
      %1265 = vmatpush1.msra.mxu0 0.0
      %1266 = vmatprep.subr.mxu0 0.0
      %1267 = vmatpush1.msra.mxu0 0.0
      %1268 = vmatprep.subr.mxu0 0.0
      %1269 = vmatpush1.msra.mxu0 0.0
      %1270 = vmatprep.subr.mxu0 0.0
      %1271 = vmatpush1.msra.mxu0 0.0
      %1272 = vmatprep.subr.mxu0 0.0
      %1273 = vmatpush1.msra.mxu0 0.0
      %1274 = vmatprep.subr.mxu0 0.0
      %1275 = vmatpush1.msra.mxu0 0.0
      %1276 = vmatprep.subr.mxu0 0.0
      %1277 = vmatpush1.msra.mxu0 0.0
      %1278 = vmatprep.subr.mxu0 0.0
      %1279 = vmatpush1.msra.mxu0 0.0
      %1280 = vmatprep.subr.mxu0 0.0
      %1281 = vmatpush1.msra.mxu0 0.0
      %1282 = vmatprep.subr.mxu0 0.0
      %1283 = vmatpush1.msra.mxu0 0.0
      %1284 = vmatprep.subr.mxu0 0.0
      %1285 = vmatpush1.msra.mxu0 0.0
      %1286 = vmatprep.subr.mxu0 0.0
      %1287 = vmatpush1.msra.mxu0 %v1182
      %1288 = vmatprep.subr.mxu0 0.0
      %1289 = vmatpush1.msra.mxu0 %v1181
      %1290 = vmatprep.subr.mxu0 0.0
      %1291 = vmatpush2.msra.mxu0 0.0
      %1292 = vmatprep.subr.mxu0 0.0
      %1293 = vmatpush2.msra.mxu0 0.0
      %1294 = vmatprep.subr.mxu0 0.0
      %1295 = vmatpush2.msra.mxu0 0.0
      %1296 = vmatprep.subr.mxu0 0.0
      %1297 = vmatpush2.msra.mxu0 0.0
      %1298 = vmatprep.subr.mxu0 0.0
      %1299 = vmatpush2.msra.mxu0 0.0
      %1300 = vmatprep.subr.mxu0 0.0
      %1301 = vmatpush2.msra.mxu0 0.0
      %1302 = vmatprep.subr.mxu0 0.0
      %1303 = vmatpush2.msra.mxu0 0.0
      %1304 = vmatprep.subr.mxu0 0.0
      %1305 = vmatpush2.msra.mxu0 0.0
      %1306 = vmatprep.subr.mxu0 0.0
      %1307 = vmatpush2.msra.mxu0 0.0
      %1308 = vmatprep.subr.mxu0 0.0
      %1309 = vmatpush2.msra.mxu0 0.0
      %1310 = vmatprep.subr.mxu0 0.0
      %1311 = vmatpush2.msra.mxu0 0.0
      %1312 = vmatprep.subr.mxu0 0.0
      %1313 = vmatpush2.msra.mxu0 0.0
      %1314 = vmatprep.subr.mxu0 0.0
      %1315 = vmatpush2.msra.mxu0 0.0
      %1316 = vmatprep.subr.mxu0 0.0
      %1317 = vmatpush2.msra.mxu0 0.0
      %1318 = vmatprep.subr.mxu0 0.0
      %1319 = vmatpush2.msra.mxu0 0.0
      %1320 = vmatprep.subr.mxu0 0.0
      %1321 = vmatpush2.msra.mxu0 0.0
      %1322 = vmatprep.mubr.f32.mxu0 0.0
      %1323 = vmatmul.mubr.f32.gmra.mxu0 %v358
      %v1324 = vpop.f32.mrf.mxu0
      %v1325 = vadd.f32 0.0, %v1324
      %v1326 = vpop.f32.mrf.mxu0
      %1327 = vmatprep.mubr.f32.mxu0 0.0
      %1328 = vmatmul.mubr.f32.gmra.mxu0 %v361
      %v1329 = vpop.f32.mrf.mxu0
      %v1330 = vadd.f32 0.0, %v1329
      %v1331 = vpop.f32.mrf.mxu0
      %1332 = vdwg.mxu0
      %v1333 = vld [vmem:[%s5 + $0x2] sm:$0x1]
      %v1334 = vlaneseq
      %v1335 = vshrl.u32 %v1334, 7
      %v1336 = vsub.s32 0, %v1335
      %v1337 = vrot.slane %v1333, %v1336
      %v1338 = vld [vmem:[%s4] sm:$0xff]
      %v1339 = vld [vmem:[%s4 + $0x8] sm:$0xff]
      %v1340 = vld [vmem:[%s4 + $0x10] sm:$0xff]
      %v1341 = vld [vmem:[%s4 + $0x18] sm:$0xff]
      %v1342 = vld [vmem:[%s4 + $0x20] sm:$0xff]
      %v1343 = vld [vmem:[%s4 + $0x28] sm:$0xff]
      %v1344 = vld [vmem:[%s4 + $0x30] sm:$0xff]
      %v1345 = vld [vmem:[%s4 + $0x38] sm:$0xff]
      %v1346 = vld [vmem:[%s4 + $0x40] sm:$0xff]
      %v1347 = vld [vmem:[%s4 + $0x48] sm:$0xff]
      %v1348 = vld [vmem:[%s4 + $0x50] sm:$0xff]
      %v1349 = vld [vmem:[%s4 + $0x58] sm:$0xff]
      %v1350 = vld [vmem:[%s4 + $0x60] sm:$0xff]
      %v1351 = vld [vmem:[%s4 + $0x68] sm:$0xff]
      %v1352 = vld [vmem:[%s4 + $0x70] sm:$0xff]
      %v1353 = vld [vmem:[%s4 + $0x78] sm:$0xff]
      %1354 = vmatprep.subr.mxu0 0.0
      %1355 = vmatpush1.msra.mxu0 %v1353
      %1356 = vmatprep.subr.mxu0 0.0
      %1357 = vmatpush1.msra.mxu0 %v1352
      %1358 = vmatprep.subr.mxu0 0.0
      %1359 = vmatpush1.msra.mxu0 %v1351
      %1360 = vmatprep.subr.mxu0 0.0
      %1361 = vmatpush1.msra.mxu0 %v1350
      %1362 = vmatprep.subr.mxu0 0.0
      %1363 = vmatpush1.msra.mxu0 %v1349
      %1364 = vmatprep.subr.mxu0 0.0
      %1365 = vmatpush1.msra.mxu0 %v1348
      %1366 = vmatprep.subr.mxu0 0.0
      %1367 = vmatpush1.msra.mxu0 %v1347
      %1368 = vmatprep.subr.mxu0 0.0
      %1369 = vmatpush1.msra.mxu0 %v1346
      %1370 = vmatprep.subr.mxu0 0.0
      %1371 = vmatpush1.msra.mxu0 %v1345
      %1372 = vmatprep.subr.mxu0 0.0
      %1373 = vmatpush1.msra.mxu0 %v1344
      %1374 = vmatprep.subr.mxu0 0.0
      %1375 = vmatpush1.msra.mxu0 %v1343
      %1376 = vmatprep.subr.mxu0 0.0
      %1377 = vmatpush1.msra.mxu0 %v1342
      %1378 = vmatprep.subr.mxu0 0.0
      %1379 = vmatpush1.msra.mxu0 %v1341
      %1380 = vmatprep.subr.mxu0 0.0
      %1381 = vmatpush1.msra.mxu0 %v1340
      %1382 = vmatprep.subr.mxu0 0.0
      %1383 = vmatpush1.msra.mxu0 %v1339
      %1384 = vmatprep.subr.mxu0 0.0
      %1385 = vmatpush1.msra.mxu0 %v1338
      %1386 = vmatprep.subr.mxu0 0.0
      %1387 = vmatpush2.msra.mxu0 0.0
      %1388 = vmatprep.subr.mxu0 0.0
      %1389 = vmatpush2.msra.mxu0 0.0
      %1390 = vmatprep.subr.mxu0 0.0
      %1391 = vmatpush2.msra.mxu0 0.0
      %1392 = vmatprep.subr.mxu0 0.0
      %1393 = vmatpush2.msra.mxu0 0.0
      %1394 = vmatprep.subr.mxu0 0.0
      %1395 = vmatpush2.msra.mxu0 0.0
      %1396 = vmatprep.subr.mxu0 0.0
      %1397 = vmatpush2.msra.mxu0 0.0
      %1398 = vmatprep.subr.mxu0 0.0
      %1399 = vmatpush2.msra.mxu0 0.0
      %1400 = vmatprep.subr.mxu0 0.0
      %1401 = vmatpush2.msra.mxu0 0.0
      %1402 = vmatprep.subr.mxu0 0.0
      %1403 = vmatpush2.msra.mxu0 0.0
      %1404 = vmatprep.subr.mxu0 0.0
      %1405 = vmatpush2.msra.mxu0 0.0
      %1406 = vmatprep.subr.mxu0 0.0
      %1407 = vmatpush2.msra.mxu0 0.0
      %1408 = vmatprep.subr.mxu0 0.0
      %1409 = vmatpush2.msra.mxu0 0.0
      %1410 = vmatprep.subr.mxu0 0.0
      %1411 = vmatpush2.msra.mxu0 0.0
      %1412 = vmatprep.subr.mxu0 0.0
      %1413 = vmatpush2.msra.mxu0 0.0
      %1414 = vmatprep.subr.mxu0 0.0
      %1415 = vmatpush2.msra.mxu0 0.0
      %1416 = vmatprep.subr.mxu0 0.0
      %1417 = vmatpush2.msra.mxu0 0.0
      %1418 = vmatprep.mubr.f32.mxu0 0.0
      %1419 = vmatmul.mubr.f32.gmra.mxu0 %v1250
      %v1420 = vpop.f32.mrf.mxu0
      %v1421 = vadd.f32 0.0, %v1420
      %v1422 = vpop.f32.mrf.mxu0
      %1423 = vmatprep.mubr.f32.mxu0 0.0
      %1424 = vmatmul.mubr.f32.gmra.mxu0 %v1255
      %v1425 = vpop.f32.mrf.mxu0
      %v1426 = vadd.f32 0.0, %v1425
      %v1427 = vpop.f32.mrf.mxu0
      %1428 = vdwg.mxu0
      %v1429 = vadd.f32 %v1337, %v1421
      %v1430 = vadd.f32 %v1337, %v1426
      %s1431 = scalar_lea.vmem %s4, 128
      %v1432 = vld [vmem:[%s1431] sm:$0xff]
      %v1433 = vld [vmem:[%s1431 + $0x8] sm:$0xff]
      %v1434 = vld [vmem:[%s1431 + $0x10] sm:$0xff]
      %v1435 = vld [vmem:[%s1431 + $0x18] sm:$0xff]
      %v1436 = vld [vmem:[%s1431 + $0x20] sm:$0xff]
      %v1437 = vld [vmem:[%s1431 + $0x28] sm:$0xff]
      %v1438 = vld [vmem:[%s1431 + $0x30] sm:$0xff]
      %v1439 = vld [vmem:[%s1431 + $0x38] sm:$0xff]
      %v1440 = vld [vmem:[%s1431 + $0x40] sm:$0xff]
      %v1441 = vld [vmem:[%s1431 + $0x48] sm:$0xff]
      %v1442 = vld [vmem:[%s1431 + $0x50] sm:$0xff]
      %v1443 = vld [vmem:[%s1431 + $0x58] sm:$0xff]
      %v1444 = vld [vmem:[%s1431 + $0x60] sm:$0xff]
      %v1445 = vld [vmem:[%s1431 + $0x68] sm:$0xff]
      %v1446 = vld [vmem:[%s1431 + $0x70] sm:$0xff]
      %v1447 = vld [vmem:[%s1431 + $0x78] sm:$0xff]
      %1448 = vmatprep.subr.mxu0 0.0
      %1449 = vmatpush1.msra.mxu0 %v1447
      %1450 = vmatprep.subr.mxu0 0.0
      %1451 = vmatpush1.msra.mxu0 %v1446
      %1452 = vmatprep.subr.mxu0 0.0
      %1453 = vmatpush1.msra.mxu0 %v1445
      %1454 = vmatprep.subr.mxu0 0.0
      %1455 = vmatpush1.msra.mxu0 %v1444
      %1456 = vmatprep.subr.mxu0 0.0
      %1457 = vmatpush1.msra.mxu0 %v1443
      %1458 = vmatprep.subr.mxu0 0.0
      %1459 = vmatpush1.msra.mxu0 %v1442
      %1460 = vmatprep.subr.mxu0 0.0
      %1461 = vmatpush1.msra.mxu0 %v1441
      %1462 = vmatprep.subr.mxu0 0.0
      %1463 = vmatpush1.msra.mxu0 %v1440
      %1464 = vmatprep.subr.mxu0 0.0
      %1465 = vmatpush1.msra.mxu0 %v1439
      %1466 = vmatprep.subr.mxu0 0.0
      %1467 = vmatpush1.msra.mxu0 %v1438
      %1468 = vmatprep.subr.mxu0 0.0
      %1469 = vmatpush1.msra.mxu0 %v1437
      %1470 = vmatprep.subr.mxu0 0.0
      %1471 = vmatpush1.msra.mxu0 %v1436
      %1472 = vmatprep.subr.mxu0 0.0
      %1473 = vmatpush1.msra.mxu0 %v1435
      %1474 = vmatprep.subr.mxu0 0.0
      %1475 = vmatpush1.msra.mxu0 %v1434
      %1476 = vmatprep.subr.mxu0 0.0
      %1477 = vmatpush1.msra.mxu0 %v1433
      %1478 = vmatprep.subr.mxu0 0.0
      %1479 = vmatpush1.msra.mxu0 %v1432
      %1480 = vmatprep.subr.mxu0 0.0
      %1481 = vmatpush2.msra.mxu0 0.0
      %1482 = vmatprep.subr.mxu0 0.0
      %1483 = vmatpush2.msra.mxu0 0.0
      %1484 = vmatprep.subr.mxu0 0.0
      %1485 = vmatpush2.msra.mxu0 0.0
      %1486 = vmatprep.subr.mxu0 0.0
      %1487 = vmatpush2.msra.mxu0 0.0
      %1488 = vmatprep.subr.mxu0 0.0
      %1489 = vmatpush2.msra.mxu0 0.0
      %1490 = vmatprep.subr.mxu0 0.0
      %1491 = vmatpush2.msra.mxu0 0.0
      %1492 = vmatprep.subr.mxu0 0.0
      %1493 = vmatpush2.msra.mxu0 0.0
      %1494 = vmatprep.subr.mxu0 0.0
      %1495 = vmatpush2.msra.mxu0 0.0
      %1496 = vmatprep.subr.mxu0 0.0
      %1497 = vmatpush2.msra.mxu0 0.0
      %1498 = vmatprep.subr.mxu0 0.0
      %1499 = vmatpush2.msra.mxu0 0.0
      %1500 = vmatprep.subr.mxu0 0.0
      %1501 = vmatpush2.msra.mxu0 0.0
      %1502 = vmatprep.subr.mxu0 0.0
      %1503 = vmatpush2.msra.mxu0 0.0
      %1504 = vmatprep.subr.mxu0 0.0
      %1505 = vmatpush2.msra.mxu0 0.0
      %1506 = vmatprep.subr.mxu0 0.0
      %1507 = vmatpush2.msra.mxu0 0.0
      %1508 = vmatprep.subr.mxu0 0.0
      %1509 = vmatpush2.msra.mxu0 0.0
      %1510 = vmatprep.subr.mxu0 0.0
      %1511 = vmatpush2.msra.mxu0 0.0
      %1512 = vmatprep.mubr.f32.mxu0 0.0
      %1513 = vmatmul.mubr.f32.gmra.mxu0 %v1181
      %v1514 = vpop.f32.mrf.mxu0
      %v1515 = vadd.f32 0.0, %v1514
      %v1516 = vpop.f32.mrf.mxu0
      %1517 = vmatprep.mubr.f32.mxu0 0.0
      %1518 = vmatmul.mubr.f32.gmra.mxu0 %v1182
      %v1519 = vpop.f32.mrf.mxu0
      %v1520 = vadd.f32 0.0, %v1519
      %v1521 = vpop.f32.mrf.mxu0
      %1522 = vdwg.mxu0
      %v1523 = vadd.f32 %v1429, %v1515
      %v1524 = vadd.f32 %v1430, %v1520
      %s1525 = scalar_lea.vmem %s4, 256
      %v1526 = vld [vmem:[%s1525] sm:$0xff]
      %v1527 = vld [vmem:[%s1525 + $0x8] sm:$0xff]
      %v1528 = vld [vmem:[%s1525 + $0x10] sm:$0xff]
      %v1529 = vld [vmem:[%s1525 + $0x18] sm:$0xff]
      %v1530 = vld [vmem:[%s1525 + $0x20] sm:$0xff]
      %v1531 = vld [vmem:[%s1525 + $0x28] sm:$0xff]
      %v1532 = vld [vmem:[%s1525 + $0x30] sm:$0xff]
      %v1533 = vld [vmem:[%s1525 + $0x38] sm:$0xff]
      %v1534 = vld [vmem:[%s1525 + $0x40] sm:$0xff]
      %v1535 = vld [vmem:[%s1525 + $0x48] sm:$0xff]
      %v1536 = vld [vmem:[%s1525 + $0x50] sm:$0xff]
      %v1537 = vld [vmem:[%s1525 + $0x58] sm:$0xff]
      %v1538 = vld [vmem:[%s1525 + $0x60] sm:$0xff]
      %v1539 = vld [vmem:[%s1525 + $0x68] sm:$0xff]
      %v1540 = vld [vmem:[%s1525 + $0x70] sm:$0xff]
      %v1541 = vld [vmem:[%s1525 + $0x78] sm:$0xff]
      %1542 = vmatprep.subr.mxu0 0.0
      %1543 = vmatpush1.msra.mxu0 %v1541
      %1544 = vmatprep.subr.mxu0 0.0
      %1545 = vmatpush1.msra.mxu0 %v1540
      %1546 = vmatprep.subr.mxu0 0.0
      %1547 = vmatpush1.msra.mxu0 %v1539
      %1548 = vmatprep.subr.mxu0 0.0
      %1549 = vmatpush1.msra.mxu0 %v1538
      %1550 = vmatprep.subr.mxu0 0.0
      %1551 = vmatpush1.msra.mxu0 %v1537
      %1552 = vmatprep.subr.mxu0 0.0
      %1553 = vmatpush1.msra.mxu0 %v1536
      %1554 = vmatprep.subr.mxu0 0.0
      %1555 = vmatpush1.msra.mxu0 %v1535
      %1556 = vmatprep.subr.mxu0 0.0
      %1557 = vmatpush1.msra.mxu0 %v1534
      %1558 = vmatprep.subr.mxu0 0.0
      %1559 = vmatpush1.msra.mxu0 %v1533
      %1560 = vmatprep.subr.mxu0 0.0
      %1561 = vmatpush1.msra.mxu0 %v1532
      %1562 = vmatprep.subr.mxu0 0.0
      %1563 = vmatpush1.msra.mxu0 %v1531
      %1564 = vmatprep.subr.mxu0 0.0
      %1565 = vmatpush1.msra.mxu0 %v1530
      %1566 = vmatprep.subr.mxu0 0.0
      %1567 = vmatpush1.msra.mxu0 %v1529
      %1568 = vmatprep.subr.mxu0 0.0
      %1569 = vmatpush1.msra.mxu0 %v1528
      %1570 = vmatprep.subr.mxu0 0.0
      %1571 = vmatpush1.msra.mxu0 %v1527
      %1572 = vmatprep.subr.mxu0 0.0
      %1573 = vmatpush1.msra.mxu0 %v1526
      %1574 = vmatprep.subr.mxu0 0.0
      %1575 = vmatpush2.msra.mxu0 0.0
      %1576 = vmatprep.subr.mxu0 0.0
      %1577 = vmatpush2.msra.mxu0 0.0
      %1578 = vmatprep.subr.mxu0 0.0
      %1579 = vmatpush2.msra.mxu0 0.0
      %1580 = vmatprep.subr.mxu0 0.0
      %1581 = vmatpush2.msra.mxu0 0.0
      %1582 = vmatprep.subr.mxu0 0.0
      %1583 = vmatpush2.msra.mxu0 0.0
      %1584 = vmatprep.subr.mxu0 0.0
      %1585 = vmatpush2.msra.mxu0 0.0
      %1586 = vmatprep.subr.mxu0 0.0
      %1587 = vmatpush2.msra.mxu0 0.0
      %1588 = vmatprep.subr.mxu0 0.0
      %1589 = vmatpush2.msra.mxu0 0.0
      %1590 = vmatprep.subr.mxu0 0.0
      %1591 = vmatpush2.msra.mxu0 0.0
      %1592 = vmatprep.subr.mxu0 0.0
      %1593 = vmatpush2.msra.mxu0 0.0
      %1594 = vmatprep.subr.mxu0 0.0
      %1595 = vmatpush2.msra.mxu0 0.0
      %1596 = vmatprep.subr.mxu0 0.0
      %1597 = vmatpush2.msra.mxu0 0.0
      %1598 = vmatprep.subr.mxu0 0.0
      %1599 = vmatpush2.msra.mxu0 0.0
      %1600 = vmatprep.subr.mxu0 0.0
      %1601 = vmatpush2.msra.mxu0 0.0
      %1602 = vmatprep.subr.mxu0 0.0
      %1603 = vmatpush2.msra.mxu0 0.0
      %1604 = vmatprep.subr.mxu0 0.0
      %1605 = vmatpush2.msra.mxu0 0.0
      %1606 = vmatprep.mubr.f32.mxu0 0.0
      %1607 = vmatmul.mubr.f32.gmra.mxu0 %v1325
      %v1608 = vpop.f32.mrf.mxu0
      %v1609 = vadd.f32 0.0, %v1608
      %v1610 = vpop.f32.mrf.mxu0
      %1611 = vmatprep.mubr.f32.mxu0 0.0
      %1612 = vmatmul.mubr.f32.gmra.mxu0 %v1330
      %v1613 = vpop.f32.mrf.mxu0
      %v1614 = vadd.f32 0.0, %v1613
      %v1615 = vpop.f32.mrf.mxu0
      %1616 = vdwg.mxu0
      %v1617 = vadd.f32 %v1523, %v1609
      %v1618 = vadd.f32 %v1524, %v1614
      %v1619 = vld [vmem:[%s1] sm:$0xff]
      %v1620 = vld [vmem:[%s1 + $0x8] sm:$0xff]
      %v1621 = vld [vmem:[%s1 + $0x10] sm:$0xff]
      %v1622 = vld [vmem:[%s1 + $0x18] sm:$0xff]
      %v1623 = vld [vmem:[%s1 + $0x20] sm:$0xff]
      %v1624 = vld [vmem:[%s1 + $0x28] sm:$0xff]
      %v1625 = vld [vmem:[%s1 + $0x30] sm:$0xff]
      %v1626 = vld [vmem:[%s1 + $0x38] sm:$0xff]
      %1627 = vmatprep.subr.mxu0 0.0
      %1628 = vmatpush1.msra.mxu0 0.0
      %1629 = vmatprep.subr.mxu0 0.0
      %1630 = vmatpush1.msra.mxu0 0.0
      %1631 = vmatprep.subr.mxu0 0.0
      %1632 = vmatpush1.msra.mxu0 0.0
      %1633 = vmatprep.subr.mxu0 0.0
      %1634 = vmatpush1.msra.mxu0 0.0
      %1635 = vmatprep.subr.mxu0 0.0
      %1636 = vmatpush1.msra.mxu0 0.0
      %1637 = vmatprep.subr.mxu0 0.0
      %1638 = vmatpush1.msra.mxu0 0.0
      %1639 = vmatprep.subr.mxu0 0.0
      %1640 = vmatpush1.msra.mxu0 0.0
      %1641 = vmatprep.subr.mxu0 0.0
      %1642 = vmatpush1.msra.mxu0 0.0
      %1643 = vmatprep.subr.mxu0 0.0
      %1644 = vmatpush1.msra.mxu0 %v1626
      %1645 = vmatprep.subr.mxu0 0.0
      %1646 = vmatpush1.msra.mxu0 %v1625
      %1647 = vmatprep.subr.mxu0 0.0
      %1648 = vmatpush1.msra.mxu0 %v1624
      %1649 = vmatprep.subr.mxu0 0.0
      %1650 = vmatpush1.msra.mxu0 %v1623
      %1651 = vmatprep.subr.mxu0 0.0
      %1652 = vmatpush1.msra.mxu0 %v1622
      %1653 = vmatprep.subr.mxu0 0.0
      %1654 = vmatpush1.msra.mxu0 %v1621
      %1655 = vmatprep.subr.mxu0 0.0
      %1656 = vmatpush1.msra.mxu0 %v1620
      %1657 = vmatprep.subr.mxu0 0.0
      %1658 = vmatpush1.msra.mxu0 %v1619
      %1659 = vmatprep.subr.mxu0 0.0
      %1660 = vmatpush2.msra.mxu0 0.0
      %1661 = vmatprep.subr.mxu0 0.0
      %1662 = vmatpush2.msra.mxu0 0.0
      %1663 = vmatprep.subr.mxu0 0.0
      %1664 = vmatpush2.msra.mxu0 0.0
      %1665 = vmatprep.subr.mxu0 0.0
      %1666 = vmatpush2.msra.mxu0 0.0
      %1667 = vmatprep.subr.mxu0 0.0
      %1668 = vmatpush2.msra.mxu0 0.0
      %1669 = vmatprep.subr.mxu0 0.0
      %1670 = vmatpush2.msra.mxu0 0.0
      %1671 = vmatprep.subr.mxu0 0.0
      %1672 = vmatpush2.msra.mxu0 0.0
      %1673 = vmatprep.subr.mxu0 0.0
      %1674 = vmatpush2.msra.mxu0 0.0
      %1675 = vmatprep.subr.mxu0 0.0
      %1676 = vmatpush2.msra.mxu0 0.0
      %1677 = vmatprep.subr.mxu0 0.0
      %1678 = vmatpush2.msra.mxu0 0.0
      %1679 = vmatprep.subr.mxu0 0.0
      %1680 = vmatpush2.msra.mxu0 0.0
      %1681 = vmatprep.subr.mxu0 0.0
      %1682 = vmatpush2.msra.mxu0 0.0
      %1683 = vmatprep.subr.mxu0 0.0
      %1684 = vmatpush2.msra.mxu0 0.0
      %1685 = vmatprep.subr.mxu0 0.0
      %1686 = vmatpush2.msra.mxu0 0.0
      %1687 = vmatprep.subr.mxu0 0.0
      %1688 = vmatpush2.msra.mxu0 0.0
      %1689 = vmatprep.subr.mxu0 0.0
      %1690 = vmatpush2.msra.mxu0 0.0
      %1691 = vmatprep.mubr.f32.mxu0 0.0
      %1692 = vmatmul.mubr.f32.gmra.mxu0 %v453
      %v1693 = vpop.f32.mrf.mxu0
      %v1694 = vadd.f32 0.0, %v1693
      %v1695 = vpop.f32.mrf.mxu0
      %1696 = vmatprep.mubr.f32.mxu0 0.0
      %1697 = vmatmul.mubr.f32.gmra.mxu0 %v456
      %v1698 = vpop.f32.mrf.mxu0
      %v1699 = vadd.f32 0.0, %v1698
      %v1700 = vpop.f32.mrf.mxu0
      %1701 = vdwg.mxu0
      %v1702 = vadd.f32 %v1617, %v1694
      %v1703 = vadd.f32 %v1618, %v1699
      %s1704 = scalar_lea.vmem %s1, 64
      %v1705 = vld [vmem:[%s1704] sm:$0xff]
      %v1706 = vld [vmem:[%s1704 + $0x8] sm:$0xff]
      %v1707 = vld [vmem:[%s1704 + $0x10] sm:$0xff]
      %v1708 = vld [vmem:[%s1704 + $0x18] sm:$0xff]
      %v1709 = vld [vmem:[%s1704 + $0x20] sm:$0xff]
      %v1710 = vld [vmem:[%s1704 + $0x28] sm:$0xff]
      %v1711 = vld [vmem:[%s1704 + $0x30] sm:$0xff]
      %v1712 = vld [vmem:[%s1704 + $0x38] sm:$0xff]
      %1713 = vmatprep.subr.mxu0 0.0
      %1714 = vmatpush1.msra.mxu0 0.0
      %1715 = vmatprep.subr.mxu0 0.0
      %1716 = vmatpush1.msra.mxu0 0.0
      %1717 = vmatprep.subr.mxu0 0.0
      %1718 = vmatpush1.msra.mxu0 0.0
      %1719 = vmatprep.subr.mxu0 0.0
      %1720 = vmatpush1.msra.mxu0 0.0
      %1721 = vmatprep.subr.mxu0 0.0
      %1722 = vmatpush1.msra.mxu0 0.0
      %1723 = vmatprep.subr.mxu0 0.0
      %1724 = vmatpush1.msra.mxu0 0.0
      %1725 = vmatprep.subr.mxu0 0.0
      %1726 = vmatpush1.msra.mxu0 0.0
      %1727 = vmatprep.subr.mxu0 0.0
      %1728 = vmatpush1.msra.mxu0 0.0
      %1729 = vmatprep.subr.mxu0 0.0
      %1730 = vmatpush1.msra.mxu0 %v1712
      %1731 = vmatprep.subr.mxu0 0.0
      %1732 = vmatpush1.msra.mxu0 %v1711
      %1733 = vmatprep.subr.mxu0 0.0
      %1734 = vmatpush1.msra.mxu0 %v1710
      %1735 = vmatprep.subr.mxu0 0.0
      %1736 = vmatpush1.msra.mxu0 %v1709
      %1737 = vmatprep.subr.mxu0 0.0
      %1738 = vmatpush1.msra.mxu0 %v1708
      %1739 = vmatprep.subr.mxu0 0.0
      %1740 = vmatpush1.msra.mxu0 %v1707
      %1741 = vmatprep.subr.mxu0 0.0
      %1742 = vmatpush1.msra.mxu0 %v1706
      %1743 = vmatprep.subr.mxu0 0.0
      %1744 = vmatpush1.msra.mxu0 %v1705
      %1745 = vmatprep.subr.mxu0 0.0
      %1746 = vmatpush2.msra.mxu0 0.0
      %1747 = vmatprep.subr.mxu0 0.0
      %1748 = vmatpush2.msra.mxu0 0.0
      %1749 = vmatprep.subr.mxu0 0.0
      %1750 = vmatpush2.msra.mxu0 0.0
      %1751 = vmatprep.subr.mxu0 0.0
      %1752 = vmatpush2.msra.mxu0 0.0
      %1753 = vmatprep.subr.mxu0 0.0
      %1754 = vmatpush2.msra.mxu0 0.0
      %1755 = vmatprep.subr.mxu0 0.0
      %1756 = vmatpush2.msra.mxu0 0.0
      %1757 = vmatprep.subr.mxu0 0.0
      %1758 = vmatpush2.msra.mxu0 0.0
      %1759 = vmatprep.subr.mxu0 0.0
      %1760 = vmatpush2.msra.mxu0 0.0
      %1761 = vmatprep.subr.mxu0 0.0
      %1762 = vmatpush2.msra.mxu0 0.0
      %1763 = vmatprep.subr.mxu0 0.0
      %1764 = vmatpush2.msra.mxu0 0.0
      %1765 = vmatprep.subr.mxu0 0.0
      %1766 = vmatpush2.msra.mxu0 0.0
      %1767 = vmatprep.subr.mxu0 0.0
      %1768 = vmatpush2.msra.mxu0 0.0
      %1769 = vmatprep.subr.mxu0 0.0
      %1770 = vmatpush2.msra.mxu0 0.0
      %1771 = vmatprep.subr.mxu0 0.0
      %1772 = vmatpush2.msra.mxu0 0.0
      %1773 = vmatprep.subr.mxu0 0.0
      %1774 = vmatpush2.msra.mxu0 0.0
      %1775 = vmatprep.subr.mxu0 0.0
      %1776 = vmatpush2.msra.mxu0 0.0
      %1777 = vmatprep.mubr.f32.mxu0 0.0
      %1778 = vmatmul.mubr.f32.gmra.mxu0 %v545
      %v1779 = vpop.f32.mrf.mxu0
      %v1780 = vadd.f32 0.0, %v1779
      %v1781 = vpop.f32.mrf.mxu0
      %1782 = vmatprep.mubr.f32.mxu0 0.0
      %1783 = vmatmul.mubr.f32.gmra.mxu0 %v548
      %v1784 = vpop.f32.mrf.mxu0
      %v1785 = vadd.f32 0.0, %v1784
      %v1786 = vpop.f32.mrf.mxu0
      %1787 = vdwg.mxu0
      %v1788 = vadd.f32 %v1702, %v1780
      %v1789 = vadd.f32 %v1703, %v1785
      %s1790 = scalar_lea.vmem %s1, 128
      %v1791 = vld [vmem:[%s1790] sm:$0xff]
      %v1792 = vld [vmem:[%s1790 + $0x8] sm:$0xff]
      %v1793 = vld [vmem:[%s1790 + $0x10] sm:$0xff]
      %v1794 = vld [vmem:[%s1790 + $0x18] sm:$0xff]
      %v1795 = vld [vmem:[%s1790 + $0x20] sm:$0xff]
      %v1796 = vld [vmem:[%s1790 + $0x28] sm:$0xff]
      %v1797 = vld [vmem:[%s1790 + $0x30] sm:$0xff]
      %v1798 = vld [vmem:[%s1790 + $0x38] sm:$0xff]
      %1799 = vmatprep.subr.mxu0 0.0
      %1800 = vmatpush1.msra.mxu0 0.0
      %1801 = vmatprep.subr.mxu0 0.0
      %1802 = vmatpush1.msra.mxu0 0.0
      %1803 = vmatprep.subr.mxu0 0.0
      %1804 = vmatpush1.msra.mxu0 0.0
      %1805 = vmatprep.subr.mxu0 0.0
      %1806 = vmatpush1.msra.mxu0 0.0
      %1807 = vmatprep.subr.mxu0 0.0
      %1808 = vmatpush1.msra.mxu0 0.0
      %1809 = vmatprep.subr.mxu0 0.0
      %1810 = vmatpush1.msra.mxu0 0.0
      %1811 = vmatprep.subr.mxu0 0.0
      %1812 = vmatpush1.msra.mxu0 0.0
      %1813 = vmatprep.subr.mxu0 0.0
      %1814 = vmatpush1.msra.mxu0 0.0
      %1815 = vmatprep.subr.mxu0 0.0
      %1816 = vmatpush1.msra.mxu0 %v1798
      %1817 = vmatprep.subr.mxu0 0.0
      %1818 = vmatpush1.msra.mxu0 %v1797
      %1819 = vmatprep.subr.mxu0 0.0
      %1820 = vmatpush1.msra.mxu0 %v1796
      %1821 = vmatprep.subr.mxu0 0.0
      %1822 = vmatpush1.msra.mxu0 %v1795
      %1823 = vmatprep.subr.mxu0 0.0
      %1824 = vmatpush1.msra.mxu0 %v1794
      %1825 = vmatprep.subr.mxu0 0.0
      %1826 = vmatpush1.msra.mxu0 %v1793
      %1827 = vmatprep.subr.mxu0 0.0
      %1828 = vmatpush1.msra.mxu0 %v1792
      %1829 = vmatprep.subr.mxu0 0.0
      %1830 = vmatpush1.msra.mxu0 %v1791
      %1831 = vmatprep.subr.mxu0 0.0
      %1832 = vmatpush2.msra.mxu0 0.0
      %1833 = vmatprep.subr.mxu0 0.0
      %1834 = vmatpush2.msra.mxu0 0.0
      %1835 = vmatprep.subr.mxu0 0.0
      %1836 = vmatpush2.msra.mxu0 0.0
      %1837 = vmatprep.subr.mxu0 0.0
      %1838 = vmatpush2.msra.mxu0 0.0
      %1839 = vmatprep.subr.mxu0 0.0
      %1840 = vmatpush2.msra.mxu0 0.0
      %1841 = vmatprep.subr.mxu0 0.0
      %1842 = vmatpush2.msra.mxu0 0.0
      %1843 = vmatprep.subr.mxu0 0.0
      %1844 = vmatpush2.msra.mxu0 0.0
      %1845 = vmatprep.subr.mxu0 0.0
      %1846 = vmatpush2.msra.mxu0 0.0
      %1847 = vmatprep.subr.mxu0 0.0
      %1848 = vmatpush2.msra.mxu0 0.0
      %1849 = vmatprep.subr.mxu0 0.0
      %1850 = vmatpush2.msra.mxu0 0.0
      %1851 = vmatprep.subr.mxu0 0.0
      %1852 = vmatpush2.msra.mxu0 0.0
      %1853 = vmatprep.subr.mxu0 0.0
      %1854 = vmatpush2.msra.mxu0 0.0
      %1855 = vmatprep.subr.mxu0 0.0
      %1856 = vmatpush2.msra.mxu0 0.0
      %1857 = vmatprep.subr.mxu0 0.0
      %1858 = vmatpush2.msra.mxu0 0.0
      %1859 = vmatprep.subr.mxu0 0.0
      %1860 = vmatpush2.msra.mxu0 0.0
      %1861 = vmatprep.subr.mxu0 0.0
      %1862 = vmatpush2.msra.mxu0 0.0
      %1863 = vmatprep.mubr.f32.mxu0 0.0
      %1864 = vmatmul.mubr.f32.gmra.mxu0 %v637
      %v1865 = vpop.f32.mrf.mxu0
      %v1866 = vadd.f32 0.0, %v1865
      %v1867 = vpop.f32.mrf.mxu0
      %1868 = vmatprep.mubr.f32.mxu0 0.0
      %1869 = vmatmul.mubr.f32.gmra.mxu0 %v640
      %v1870 = vpop.f32.mrf.mxu0
      %v1871 = vadd.f32 0.0, %v1870
      %v1872 = vpop.f32.mrf.mxu0
      %1873 = vdwg.mxu0
      %v1874 = vadd.f32 %v1788, %v1866
      %v1875 = vadd.f32 %v1789, %v1871
      %v1876 = vmax.f32 %v1874, 0.0
      %v1877 = vmax.f32 %v1875, 0.0
      %1878 = vst [vmem:[%s251] sm:$0xff] %v1876
      %1879 = vst [vmem:[%s251 + $0x8] sm:$0xff] %v1877
      %p1880 = scmp.lt.s32.totalorder %s17, 1
      %s1881 = scalar_select %p1880, %s17, 1
      %s1882 = smul.addr %s1881, 2
      %s1883 = smul.addr %s1882, 8
      %s1884 = scalar_lea.vmem %s6, %s1883
      // Predicated region
      $region45: #{extract_block_forward.1} parent=43 // pred_check
        %p1885 = pneg %p166
      $region46: #{extract_block_forward.1} parent=43 // pred_check_branch
        %1887 = sbr.rel (%p1885) target = $region48
      $region47: #{extract_block_forward.1} parent=43 // pred_region
        _
      $region48: #{extract_block_forward.1} parent=43 // pred_fallthru
        _
    $region44: #{extract_block_forward.1} parent=5 // pred_fallthru
      _
    %p1888 = scmp.le.s32.totalorder 2, %s12
    // Predicated region
    $region49: #{extract_block_forward.1} parent=5 // pred_check
      %p1889 = pneg %p1888
    $region50: #{extract_block_forward.1} parent=5 // pred_check_branch
      %1891 = sbr.rel (%p1889) target = $region52
    $region51: #{extract_block_forward.1} parent=5 // pred_region
      %s1892 = ssub.s32 %s12, 2
      // Predicated region
      $region53: #{extract_block_forward.1} parent=51 // pred_check
        %p1893 = pneg %p172
      $region54: #{extract_block_forward.1} parent=51 // pred_check_branch
        %1895 = sbr.rel (%p1893) target = $region56
      $region55: #{extract_block_forward.1} parent=51 // pred_region
        %p1896 = scmp.lt.s32.totalorder %s18, 1
        %s1897 = scalar_select %p1896, %s18, 1
        %s1898 = smul.addr %s1897, 2
        %s1899 = smul.addr %s1898, 8
        %s1900 = scalar_lea.vmem %s6, %s1899
      $region56: #{extract_block_forward.1} parent=51 // pred_fallthru
        _
    $region52: #{extract_block_forward.1} parent=5 // pred_fallthru
      _
  $region6: #{extract_block_forward.1} parent=0 // loop_footer
    %s16 = sadd.s32 1, %s12
  $region7: #{extract_block_forward.1} parent=0 // loop_footer_branch
    %11 = sbr.rel target = $region3
  $region8: #{extract_block_forward.1} parent=0 // loop_exit
    _

</llo_original>
